<compile_context>
chip_gen: v5e
topology: v5e:2x2
jax: 0.10.0
libtpu: 0.0.40
codegen_flags: <defaults>
</compile_context>

<pallas_src>
import functools
import math

import jax
import jax.numpy as jnp
from jax import lax
from jax.experimental import pallas as pl
from jax.experimental.pallas import tpu as pltpu

BF16 = jnp.bfloat16
F32 = jnp.float32


# ----------------------------- in-kernel helpers ----------------------------

def _softplus(v):
    # numerically stable softplus = max(v,0) + log1p(exp(-|v|))
    return jnp.maximum(v, 0.0) + jnp.log1p(jnp.exp(-jnp.abs(v)))


def _layernorm(x, a, b, d, eps):
    # repo-style LayerNorm: unbiased std and (std + eps)
    mean = jnp.mean(x, axis=-1, keepdims=True)
    var = jnp.sum((x - mean) ** 2, axis=-1, keepdims=True) * (1.0 / (d - 1))
    std = jnp.sqrt(var)
    return a * (x - mean) * pl.reciprocal(std + eps, approx=True) + b


# ------------------------- fully fused forward kernel ------------------------

def _fused_forward_kernel(*refs, add_eps, n_layers, seq, d_model, eps):
    if add_eps:
        (x_ref, mb_ref, n1_ref, n2_ref, ew_ref, eb_ref,
         lna_ref, lnb_ref, wqkv_ref, bqkv_ref, wo_ref, bo_ref,
         d1w_ref, d1b_ref, cw_ref, cb_ref, d2w_ref, d2b_ref,
         low_ref, lob_ref, na_ref, nb_ref,
         dw1_ref, db1_ref, dw2_ref, db2_ref,
         z_ref, emb_ref, dec_ref) = refs
    else:
        (x_ref, mb_ref,
         lna_ref, lnb_ref, wqkv_ref, bqkv_ref, wo_ref, bo_ref,
         d1w_ref, d1b_ref, cw_ref, cb_ref, d2w_ref, d2b_ref,
         low_ref, lob_ref, na_ref, nb_ref,
         dw1_ref, db1_ref, dw2_ref, db2_ref,
         z_ref, emb_ref, dec_ref) = refs

    def dense(a, w_ref, b_ref):
        return jnp.dot(a.astype(BF16), w_ref[...],
                       preferred_element_type=F32) + b_ref[...]

    x = x_ref[0]                                 # (S, D) residual stream, f32
    mb = mb_ref[0]                               # (1, S) additive mask bias

    # ---- encoder layers: unrolled at trace time (static, small L);
    #      stacked (L, ...) weights are VMEM-resident (constant index_maps) ----
    for l in range(n_layers):
        xn = _layernorm(x, lna_ref[l], lnb_ref[l], d_model, eps)

        # fused Q|K|V projection; 1/sqrt(d) already folded into Wq / bq
        qkv = jnp.dot(xn.astype(BF16), wqkv_ref[l],
                      preferred_element_type=F32) + bqkv_ref[l]   # (S, 3D)
        q = qkv[:, :d_model]
        k = qkv[:, d_model:2 * d_model]
        v = qkv[:, 2 * d_model:]

        # scores = q @ k^T + additive mask bias (precomputed outside)
        s = lax.dot_general(q.astype(BF16), k.astype(BF16),
                            (((1,), (1,)), ((), ())),
                            preferred_element_type=F32)           # (S, S)
        s = s + mb                                                # mask keys
        s = s - jnp.max(s, axis=-1, keepdims=True)
        p = jnp.exp(s)
        p = p * pl.reciprocal(jnp.sum(p, axis=-1, keepdims=True), approx=True)

        a = jnp.dot(p.astype(BF16), v.astype(BF16), preferred_element_type=F32)
        a = jnp.dot(a.astype(BF16), wo_ref[l],
                    preferred_element_type=F32) + bo_ref[l]
        x = x + a                                # dropout = identity

    # --------------------------------- tail ---------------------------------
    e = x
    if add_eps:                                  # AddEps: x + tanh(Linear(noise))
        e = e + jnp.tanh(dense(n1_ref[0], ew_ref, eb_ref))

    y = _softplus(dense(e, d1w_ref, d1b_ref))    # dot_cnn1 (k=1 conv)
    if add_eps:
        y = y + jnp.tanh(dense(n2_ref[0], ew_ref, eb_ref))

    # cnn_layer: causal Conv1d(D, 2D, k=5, padding=4)[:, :, :-4] + softplus.
    #   out[t] = sum_kk y[t - (4 - kk)] @ W_kk      (zeros for t - shift < 0)
    # Shifted rows come from pltpu.roll (XLU sublane rotate, off the MXU/VPU
    # critical path) + an iota mask; every matmul operand is bf16 — no f32
    # (S,S) shift-select matmuls, no host-side im2col.
    t_i = lax.broadcasted_iota(jnp.int32, (seq, d_model), 0)
    acc = jnp.zeros((seq, 2 * d_model), F32)
    for kk in range(5):
        shift = 4 - kk
        if shift == 0:
            sh = y
        else:
            sh = jnp.where(t_i >= shift,
                           pltpu.roll(y, shift=shift, axis=0), 0.0)
        acc = acc + jnp.dot(sh.astype(BF16), cw_ref[kk],
                            preferred_element_type=F32)
    conv = _softplus(acc + cb_ref[...])          # (S, 2D)

    y2 = _softplus(dense(conv, d2w_ref, d2b_ref))  # dot_cnn2 (k=1 conv)
    y3 = x + y2                                    # residual (dropout = id)
    y4 = dense(y3, low_ref, lob_ref)               # linear_o
    z = _layernorm(y4, na_ref[...], nb_ref[...], d_model, eps)
    z_ref[0] = z

    h = dense(z, dw1_ref, db1_ref)                 # decode linear1 -> out_embed
    emb_ref[0] = h
    # linear2: vocab padded to 128 lanes -> unmasked lane-dense store
    dec_ref[0] = dense(jnp.tanh(h), dw2_ref, db2_ref)


def fused_forward(x0, mask_bias, params, noise1=None, noise2=None, *,
                  add_eps=False, ln_eps=1e-6):
    B, S, D = x0.shape
    L = params["wqkv"].shape[0]
    E = params["dec1_b"].shape[-1]
    VP = params["dec2_b"].shape[-1]

    batched_sd = pl.BlockSpec((1, S, D), lambda b: (b, 0, 0))

    def resident(arr):
        # full-array block, constant index_map -> fetched once, stays in VMEM
        nd = arr.ndim
        return pl.BlockSpec(arr.shape, lambda b, nd=nd: (0,) * nd)

    args = [x0, mask_bias]
    in_specs = [batched_sd, pl.BlockSpec((1, 1, S), lambda b: (b, 0, 0))]
    if add_eps:
        args += [noise1, noise2, params["eps_w"], params["eps_b"]]
        in_specs += [batched_sd, batched_sd,
                     resident(params["eps_w"]), resident(params["eps_b"])]
    for name in ("lna", "lnb", "wqkv", "bqkv", "wo", "bo",
                 "dot1_w", "dot1_b", "cnn_w", "cnn_b", "dot2_w", "dot2_b",
                 "lo_w", "lo_b", "norm_a", "norm_b",
                 "dec1_w", "dec1_b", "dec2_w", "dec2_b"):
        args.append(params[name])
        in_specs.append(resident(params[name]))

    kern = functools.partial(_fused_forward_kernel, add_eps=add_eps,
                             n_layers=L, seq=S, d_model=D, eps=ln_eps)
    # TODO(synk): z / out_embed last dims (32 / 16) still use masked stores;
    # a lane-dense (S*D) flatten needs an in-kernel relayout that isn't worth
    # the lowering risk at these tiny shapes.
    return pl.pallas_call(
        kern,
        out_shape=(jax.ShapeDtypeStruct((B, S, D), F32),    # z (encoder output)
                   jax.ShapeDtypeStruct((B, S, E), F32),    # out_embed
                   jax.ShapeDtypeStruct((B, S, VP), F32)),  # padded decoder logits
        grid=(B,),
        in_specs=in_specs,
        out_specs=(pl.BlockSpec((1, S, D), lambda b: (b, 0, 0)),
                   pl.BlockSpec((1, S, E), lambda b: (b, 0, 0)),
                   pl.BlockSpec((1, S, VP), lambda b: (b, 0, 0))),
        compiler_params=pltpu.CompilerParams(
            dimension_semantics=("parallel",)),
    )(*args)


# ------------------------------ plain-JAX glue -------------------------------

def positional_encoding(max_len, d_model):
    position = jnp.arange(max_len, dtype=jnp.float32)[:, None]
    div_term = jnp.exp(
        jnp.arange(0, d_model, 2, dtype=jnp.float32) * -(math.log(10000.0) / d_model))
    pe = jnp.zeros((max_len, d_model), jnp.float32)
    pe = pe.at[:, 0::2].set(jnp.sin(position * div_term))
    pe = pe.at[:, 1::2].set(jnp.cos(position * div_term))
    return pe


def embed(x_ids, table, pe, d_model):
    # Embeddings: lut(x) * sqrt(d_model) + PositionalEncoding (dropout = id)
    seq = x_ids.shape[1]
    return jnp.take(table, x_ids, axis=0) * math.sqrt(d_model) + pe[:seq]


def init_params(key, d_model, item_embed, vocab, n_layers):
    keys = iter(jax.random.split(key, 256))
    d = d_model

    def xavier(shape):
        bound = math.sqrt(6.0 / (shape[-2] + shape[-1]))
        return jax.random.uniform(next(keys), shape, jnp.float32, -bound, bound)

    def bias(shape):
        return jax.random.uniform(next(keys), shape, jnp.float32, -0.05, 0.05)

    # 1/sqrt(d) attention scale folded into the Q projection (weight + bias),
    # so the kernel never multiplies the (S,S) score tile.
    scale = 1.0 / math.sqrt(d)
    wq = xavier((n_layers, d, d)) * scale
    wk = xavier((n_layers, d, d))
    wv = xavier((n_layers, d, d))
    bq = bias((n_layers, 1, d)) * scale
    bk = bias((n_layers, 1, d))
    bv = bias((n_layers, 1, d))

    p = {
        "pe": positional_encoding(5000, d),
        "emb_real": xavier((vocab, d)),          # Model.embedding lut
        "emb_src": xavier((vocab, d)),           # model.src_embed lut
        # per-layer params stacked on a leading layer axis; weights pre-cast bf16
        "lna": jnp.ones((n_layers, 1, d), jnp.float32),
        "lnb": jnp.zeros((n_layers, 1, d), jnp.float32),
        "wqkv": jnp.concatenate([wq, wk, wv], axis=-1).astype(BF16),
        "bqkv": jnp.concatenate([bq, bk, bv], axis=-1),
        "wo": xavier((n_layers, d, d)).astype(BF16),
        "bo": bias((n_layers, 1, d)),
        # AddEps linear
        "eps_w": xavier((d, d)).astype(BF16),
        "eps_b": bias((1, d)),
        # encoder tail
        "dot1_w": xavier((d, d)).astype(BF16),            # Conv1d k=1
        "dot1_b": bias((1, d)),
        "cnn_w": xavier((5, d, 2 * d)).astype(BF16),      # Conv1d k=5, per-tap slices
        "cnn_b": bias((1, 2 * d)),
        "dot2_w": xavier((2 * d, d)).astype(BF16),        # Conv1d k=1
        "dot2_b": bias((1, d)),
        "lo_w": xavier((d, d)).astype(BF16),              # linear_o
        "lo_b": bias((1, d)),
        "norm_a": jnp.ones((1, d), jnp.float32),
        "norm_b": jnp.zeros((1, d), jnp.float32),
        # decode head
        "dec1_w": xavier((d, item_embed)).astype(BF16),
        "dec1_b": bias((1, item_embed)),
    }
    # dec2 padded to a 128-lane-dense output; sliced back to vocab outside
    vp = ((vocab + 127) // 128) * 128
    w2 = xavier((item_embed, vocab))
    b2 = bias((vocab,))
    p["dec2_w"] = jnp.zeros((item_embed, vp), jnp.float32).at[:, :vocab].set(w2).astype(BF16)
    p["dec2_b"] = jnp.zeros((1, vp), jnp.float32).at[0, :vocab].set(b2)
    return p


def model_forward(params, x_ids, mask, *, cfg, add_eps=False, eps_key=None):
    B, S = x_ids.shape
    d = cfg["d_model"]

    # x_real = self.embedding(x)
    x_real = embed(x_ids, params["emb_real"], params["pe"], d)

    # ---- model.encode(x, mask, add_eps): src_embed, then everything fused ----
    x0 = embed(x_ids, params["emb_src"], params["pe"], d)
    # additive mask bias computed once (0 / -1e9), shared by all layers
    maskb = jnp.where(mask == 0, -1000000000.0, 0.0).astype(jnp.float32)  # (B,1,S)

    if add_eps:
        k1, k2 = jax.random.split(eps_key)
        noise1 = jax.random.normal(k1, (B, S, d), jnp.float32)
        noise2 = jax.random.normal(k2, (B, S, d), jnp.float32)
    else:
        noise1 = noise2 = None

    # ---- single fused kernel: encoder layers + conv tail + decode head ----
    z, out_embed, dec_pad = fused_forward(x0, maskb, params, noise1, noise2,
                                          add_eps=add_eps)
    dec_out = dec_pad[..., :cfg["vocab"]]
    return dec_out, x_real, z, out_embed


# ---------------------------------- main -------------------------------------

if __name__ == "__main__":
    hyper_params = {
        "d_model": 32,
        "item_embed_size": 16,
        "total_items": 50,
        "N_of_layers": 2,
        "dropout": 0.1,
    }
    B, S = 2, 8
    vocab = hyper_params["total_items"] + 1
    cfg = {"d_model": hyper_params["d_model"],
           "item_embed": hyper_params["item_embed_size"],
           "vocab": vocab}

    key = jax.random.PRNGKey(0)
    pkey, xkey, ekey = jax.random.split(key, 3)

    params = init_params(pkey, cfg["d_model"], cfg["item_embed"], vocab,
                         hyper_params["N_of_layers"])

    x_ids = jax.random.randint(xkey, (B, S), 0, vocab)
    lengths = jnp.array([8, 6])
    mask = (jnp.arange(S)[None, :] < lengths[:, None]).astype(jnp.int32)[:, None, :]  # (B,1,S)

    fwd = jax.jit(functools.partial(model_forward, cfg=cfg, add_eps=False))
    dec_out, x_real, z_inferred, out_embed = fwd(params, x_ids, mask)

    jax.block_until_ready((dec_out, x_real, z_inferred, out_embed))
    assert dec_out.shape == (B, S, vocab)
    assert x_real.shape == (B, S, cfg["d_model"])
    assert z_inferred.shape == (B, S, cfg["d_model"])
    assert out_embed.shape == (B, S, cfg["item_embed"])
    assert bool(jnp.all(jnp.isfinite(dec_out)))
    print("KERNEL_OK")
</pallas_src>

<mosaic_0001>
module attributes {stable_mosaic.version = 11 : i64} {
  func.func @_fused_forward_kernel(%arg0: i32, %arg1: memref<1x8x32xf32, #tpu.memory_space<vmem>>, %arg2: memref<1x1x8xf32, #tpu.memory_space<vmem>>, %arg3: memref<2x1x32xf32, #tpu.memory_space<vmem>>, %arg4: memref<2x1x32xf32, #tpu.memory_space<vmem>>, %arg5: memref<2x32x96xbf16, #tpu.memory_space<vmem>>, %arg6: memref<2x1x96xf32, #tpu.memory_space<vmem>>, %arg7: memref<2x32x32xbf16, #tpu.memory_space<vmem>>, %arg8: memref<2x1x32xf32, #tpu.memory_space<vmem>>, %arg9: memref<32x32xbf16, #tpu.memory_space<vmem>>, %arg10: memref<1x32xf32, #tpu.memory_space<vmem>>, %arg11: memref<5x32x64xbf16, #tpu.memory_space<vmem>>, %arg12: memref<1x64xf32, #tpu.memory_space<vmem>>, %arg13: memref<64x32xbf16, #tpu.memory_space<vmem>>, %arg14: memref<1x32xf32, #tpu.memory_space<vmem>>, %arg15: memref<32x32xbf16, #tpu.memory_space<vmem>>, %arg16: memref<1x32xf32, #tpu.memory_space<vmem>>, %arg17: memref<1x32xf32, #tpu.memory_space<vmem>>, %arg18: memref<1x32xf32, #tpu.memory_space<vmem>>, %arg19: memref<32x16xbf16, #tpu.memory_space<vmem>>, %arg20: memref<1x16xf32, #tpu.memory_space<vmem>>, %arg21: memref<16x128xbf16, #tpu.memory_space<vmem>>, %arg22: memref<1x128xf32, #tpu.memory_space<vmem>>, %arg23: memref<1x8x32xf32, #tpu.memory_space<vmem>>, %arg24: memref<1x8x16xf32, #tpu.memory_space<vmem>>, %arg25: memref<1x8x128xf32, #tpu.memory_space<vmem>>) attributes {dimension_semantics = [#tpu.dimension_semantics<parallel>], iteration_bounds = array<i64: 2>, scalar_prefetch = 0 : i64, scratch_operands = 0 : i64, tpu.core_type = #tpu.core_type<tc>, window_params = [{transform_indices = @transform_0, window_bounds = array<i64: 1, 8, 32>}, {transform_indices = @transform_1, window_bounds = array<i64: 1, 1, 8>}, {pipeline_mode = #tpu.pipeline_mode<synchronous>, transform_indices = @transform_2, window_bounds = array<i64: 2, 1, 32>}, {pipeline_mode = #tpu.pipeline_mode<synchronous>, transform_indices = @transform_3, window_bounds = array<i64: 2, 1, 32>}, {pipeline_mode = #tpu.pipeline_mode<synchronous>, transform_indices = @transform_4, window_bounds = array<i64: 2, 32, 96>}, {pipeline_mode = #tpu.pipeline_mode<synchronous>, transform_indices = @transform_5, window_bounds = array<i64: 2, 1, 96>}, {pipeline_mode = #tpu.pipeline_mode<synchronous>, transform_indices = @transform_6, window_bounds = array<i64: 2, 32, 32>}, {pipeline_mode = #tpu.pipeline_mode<synchronous>, transform_indices = @transform_7, window_bounds = array<i64: 2, 1, 32>}, {pipeline_mode = #tpu.pipeline_mode<synchronous>, transform_indices = @transform_8, window_bounds = array<i64: 32, 32>}, {pipeline_mode = #tpu.pipeline_mode<synchronous>, transform_indices = @transform_9, window_bounds = array<i64: 1, 32>}, {pipeline_mode = #tpu.pipeline_mode<synchronous>, transform_indices = @transform_10, window_bounds = array<i64: 5, 32, 64>}, {pipeline_mode = #tpu.pipeline_mode<synchronous>, transform_indices = @transform_11, window_bounds = array<i64: 1, 64>}, {pipeline_mode = #tpu.pipeline_mode<synchronous>, transform_indices = @transform_12, window_bounds = array<i64: 64, 32>}, {pipeline_mode = #tpu.pipeline_mode<synchronous>, transform_indices = @transform_13, window_bounds = array<i64: 1, 32>}, {pipeline_mode = #tpu.pipeline_mode<synchronous>, transform_indices = @transform_14, window_bounds = array<i64: 32, 32>}, {pipeline_mode = #tpu.pipeline_mode<synchronous>, transform_indices = @transform_15, window_bounds = array<i64: 1, 32>}, {pipeline_mode = #tpu.pipeline_mode<synchronous>, transform_indices = @transform_16, window_bounds = array<i64: 1, 32>}, {pipeline_mode = #tpu.pipeline_mode<synchronous>, transform_indices = @transform_17, window_bounds = array<i64: 1, 32>}, {pipeline_mode = #tpu.pipeline_mode<synchronous>, transform_indices = @transform_18, window_bounds = array<i64: 32, 16>}, {pipeline_mode = #tpu.pipeline_mode<synchronous>, transform_indices = @transform_19, window_bounds = array<i64: 1, 16>}, {pipeline_mode = #tpu.pipeline_mode<synchronous>, transform_indices = @transform_20, window_bounds = array<i64: 16, 128>}, {pipeline_mode = #tpu.pipeline_mode<synchronous>, transform_indices = @transform_21, window_bounds = array<i64: 1, 128>}, {transform_indices = @transform_22, window_bounds = array<i64: 1, 8, 32>}, {transform_indices = @transform_23, window_bounds = array<i64: 1, 8, 16>}, {transform_indices = @transform_24, window_bounds = array<i64: 1, 8, 128>}]} {
    %c0 = arith.constant 0 : index
    %c0_0 = arith.constant 0 : index
    %c0_1 = arith.constant 0 : index
    %0 = vector.load %arg1[%c0, %c0_0, %c0_1] : memref<1x8x32xf32, #tpu.memory_space<vmem>>, vector<1x8x32xf32>
    %1 = vector.shape_cast %0 : vector<1x8x32xf32> to vector<8x32xf32>
    %c0_2 = arith.constant 0 : index
    %c0_3 = arith.constant 0 : index
    %c0_4 = arith.constant 0 : index
    %2 = vector.load %arg2[%c0_2, %c0_3, %c0_4] : memref<1x1x8xf32, #tpu.memory_space<vmem>>, vector<1x1x8xf32>
    %3 = vector.shape_cast %2 : vector<1x1x8xf32> to vector<1x8xf32>
    %c0_5 = arith.constant 0 : index
    %c0_6 = arith.constant 0 : index
    %c0_7 = arith.constant 0 : index
    %4 = vector.load %arg3[%c0_5, %c0_6, %c0_7] : memref<2x1x32xf32, #tpu.memory_space<vmem>>, vector<1x1x32xf32>
    %5 = vector.shape_cast %4 : vector<1x1x32xf32> to vector<1x32xf32>
    %c0_8 = arith.constant 0 : index
    %c0_9 = arith.constant 0 : index
    %c0_10 = arith.constant 0 : index
    %6 = vector.load %arg4[%c0_8, %c0_9, %c0_10] : memref<2x1x32xf32, #tpu.memory_space<vmem>>, vector<1x1x32xf32>
    %7 = vector.shape_cast %6 : vector<1x1x32xf32> to vector<1x32xf32>
    %cst = arith.constant dense<0.000000e+00> : vector<8xf32>
    %8 = vector.multi_reduction <add>, %1, %cst [1] : vector<8x32xf32> to vector<8xf32>
    %9 = vector.shape_cast %8 : vector<8xf32> to vector<8x1xf32>
    %cst_11 = arith.constant 3.200000e+01 : f32
    %10 = vector.broadcast %cst_11 : f32 to vector<8x1xf32>
    %11 = arith.divf %9, %10 : vector<8x1xf32>
    %12 = vector.broadcast %11 : vector<8x1xf32> to vector<8x32xf32>
    %13 = arith.subf %1, %12 : vector<8x32xf32>
    %14 = arith.mulf %13, %13 : vector<8x32xf32>
    %cst_12 = arith.constant dense<0.000000e+00> : vector<8xf32>
    %15 = vector.multi_reduction <add>, %14, %cst_12 [1] : vector<8x32xf32> to vector<8xf32>
    %16 = vector.shape_cast %15 : vector<8xf32> to vector<8x1xf32>
    %cst_13 = arith.constant 0.0322580636 : f32
    %17 = vector.broadcast %cst_13 : f32 to vector<8x1xf32>
    %18 = arith.mulf %16, %17 : vector<8x1xf32>
    %19 = math.sqrt %18 : vector<8x1xf32>
    %20 = vector.broadcast %11 : vector<8x1xf32> to vector<8x32xf32>
    %21 = arith.subf %1, %20 : vector<8x32xf32>
    %22 = vector.broadcast %5 : vector<1x32xf32> to vector<8x32xf32>
    %23 = arith.mulf %22, %21 : vector<8x32xf32>
    %cst_14 = arith.constant 9.99999997E-7 : f32
    %24 = vector.broadcast %cst_14 : f32 to vector<8x1xf32>
    %25 = arith.addf %19, %24 : vector<8x1xf32>
    %26 = tpu.reciprocal %25 {approx = true} : vector<8x1xf32> -> vector<8x1xf32>
    %27 = vector.broadcast %26 : vector<8x1xf32> to vector<8x32xf32>
    %28 = arith.mulf %23, %27 : vector<8x32xf32>
    %29 = vector.broadcast %7 : vector<1x32xf32> to vector<8x32xf32>
    %30 = arith.addf %28, %29 : vector<8x32xf32>
    %31 = arith.truncf %30 : vector<8x32xf32> to vector<8x32xbf16>
    %c0_15 = arith.constant 0 : index
    %c0_16 = arith.constant 0 : index
    %c0_17 = arith.constant 0 : index
    %32 = vector.load %arg5[%c0_15, %c0_16, %c0_17] : memref<2x32x96xbf16, #tpu.memory_space<vmem>>, vector<1x32x96xbf16>
    %33 = vector.shape_cast %32 : vector<1x32x96xbf16> to vector<32x96xbf16>
    %cst_18 = arith.constant dense<0.000000e+00> : vector<8x96xf32>
    %34 = tpu.matmul %31, %33, %cst_18 {dimension_numbers = #tpu.dot_dimension_numbers<[1], [0], [0], [1], [0, 0, 1, 1], [], []>} : vector<8x32xbf16>, vector<32x96xbf16>, vector<8x96xf32> -> vector<8x96xf32>
    %c0_19 = arith.constant 0 : index
    %c0_20 = arith.constant 0 : index
    %c0_21 = arith.constant 0 : index
    %35 = vector.load %arg6[%c0_19, %c0_20, %c0_21] : memref<2x1x96xf32, #tpu.memory_space<vmem>>, vector<1x1x96xf32>
    %36 = vector.shape_cast %35 : vector<1x1x96xf32> to vector<1x96xf32>
    %37 = vector.broadcast %36 : vector<1x96xf32> to vector<8x96xf32>
    %38 = arith.addf %34, %37 : vector<8x96xf32>
    %39 = vector.extract_strided_slice %38 {offsets = [0, 0], sizes = [8, 32], strides = [1, 1]} : vector<8x96xf32> to vector<8x32xf32>
    %40 = vector.extract_strided_slice %38 {offsets = [0, 32], sizes = [8, 32], strides = [1, 1]} : vector<8x96xf32> to vector<8x32xf32>
    %41 = vector.extract_strided_slice %38 {offsets = [0, 64], sizes = [8, 32], strides = [1, 1]} : vector<8x96xf32> to vector<8x32xf32>
    %42 = arith.truncf %39 : vector<8x32xf32> to vector<8x32xbf16>
    %43 = arith.truncf %40 : vector<8x32xf32> to vector<8x32xbf16>
    %cst_22 = arith.constant dense<0.000000e+00> : vector<8x8xf32>
    %44 = tpu.matmul %42, %43, %cst_22 {dimension_numbers = #tpu.dot_dimension_numbers<[1], [1], [0], [0], [0, 0, 1, 0], [], []>} : vector<8x32xbf16>, vector<8x32xbf16>, vector<8x8xf32> -> vector<8x8xf32>
    %45 = vector.broadcast %3 : vector<1x8xf32> to vector<8x8xf32>
    %46 = arith.addf %44, %45 : vector<8x8xf32>
    %cst_23 = arith.constant dense<0xFF800000> : vector<8xf32>
    %47 = vector.multi_reduction <maximumf>, %46, %cst_23 [1] : vector<8x8xf32> to vector<8xf32>
    %48 = vector.shape_cast %47 : vector<8xf32> to vector<8x1xf32>
    %49 = vector.broadcast %48 : vector<8x1xf32> to vector<8x8xf32>
    %50 = arith.subf %46, %49 : vector<8x8xf32>
    %51 = math.exp %50 : vector<8x8xf32>
    %cst_24 = arith.constant dense<0.000000e+00> : vector<8xf32>
    %52 = vector.multi_reduction <add>, %51, %cst_24 [1] : vector<8x8xf32> to vector<8xf32>
    %53 = vector.shape_cast %52 : vector<8xf32> to vector<8x1xf32>
    %54 = tpu.reciprocal %53 {approx = true} : vector<8x1xf32> -> vector<8x1xf32>
    %55 = vector.broadcast %54 : vector<8x1xf32> to vector<8x8xf32>
    %56 = arith.mulf %51, %55 : vector<8x8xf32>
    %57 = arith.truncf %56 : vector<8x8xf32> to vector<8x8xbf16>
    %58 = arith.truncf %41 : vector<8x32xf32> to vector<8x32xbf16>
    %cst_25 = arith.constant dense<0.000000e+00> : vector<8x32xf32>
    %59 = tpu.matmul %57, %58, %cst_25 {dimension_numbers = #tpu.dot_dimension_numbers<[1], [0], [0], [1], [0, 0, 1, 1], [], []>} : vector<8x8xbf16>, vector<8x32xbf16>, vector<8x32xf32> -> vector<8x32xf32>
    %60 = arith.truncf %59 : vector<8x32xf32> to vector<8x32xbf16>
    %c0_26 = arith.constant 0 : index
    %c0_27 = arith.constant 0 : index
    %c0_28 = arith.constant 0 : index
    %61 = vector.load %arg7[%c0_26, %c0_27, %c0_28] : memref<2x32x32xbf16, #tpu.memory_space<vmem>>, vector<1x32x32xbf16>
    %62 = vector.shape_cast %61 : vector<1x32x32xbf16> to vector<32x32xbf16>
    %cst_29 = arith.constant dense<0.000000e+00> : vector<8x32xf32>
    %63 = tpu.matmul %60, %62, %cst_29 {dimension_numbers = #tpu.dot_dimension_numbers<[1], [0], [0], [1], [0, 0, 1, 1], [], []>} : vector<8x32xbf16>, vector<32x32xbf16>, vector<8x32xf32> -> vector<8x32xf32>
    %c0_30 = arith.constant 0 : index
    %c0_31 = arith.constant 0 : index
    %c0_32 = arith.constant 0 : index
    %64 = vector.load %arg8[%c0_30, %c0_31, %c0_32] : memref<2x1x32xf32, #tpu.memory_space<vmem>>, vector<1x1x32xf32>
    %65 = vector.shape_cast %64 : vector<1x1x32xf32> to vector<1x32xf32>
    %66 = vector.broadcast %65 : vector<1x32xf32> to vector<8x32xf32>
    %67 = arith.addf %63, %66 : vector<8x32xf32>
    %68 = arith.addf %1, %67 : vector<8x32xf32>
    %c1 = arith.constant 1 : index
    %c0_33 = arith.constant 0 : index
    %c0_34 = arith.constant 0 : index
    %69 = vector.load %arg3[%c1, %c0_33, %c0_34] : memref<2x1x32xf32, #tpu.memory_space<vmem>>, vector<1x1x32xf32>
    %70 = vector.shape_cast %69 : vector<1x1x32xf32> to vector<1x32xf32>
    %c1_35 = arith.constant 1 : index
    %c0_36 = arith.constant 0 : index
    %c0_37 = arith.constant 0 : index
    %71 = vector.load %arg4[%c1_35, %c0_36, %c0_37] : memref<2x1x32xf32, #tpu.memory_space<vmem>>, vector<1x1x32xf32>
    %72 = vector.shape_cast %71 : vector<1x1x32xf32> to vector<1x32xf32>
    %cst_38 = arith.constant dense<0.000000e+00> : vector<8xf32>
    %73 = vector.multi_reduction <add>, %68, %cst_38 [1] : vector<8x32xf32> to vector<8xf32>
    %74 = vector.shape_cast %73 : vector<8xf32> to vector<8x1xf32>
    %cst_39 = arith.constant 3.200000e+01 : f32
    %75 = vector.broadcast %cst_39 : f32 to vector<8x1xf32>
    %76 = arith.divf %74, %75 : vector<8x1xf32>
    %77 = vector.broadcast %76 : vector<8x1xf32> to vector<8x32xf32>
    %78 = arith.subf %68, %77 : vector<8x32xf32>
    %79 = arith.mulf %78, %78 : vector<8x32xf32>
    %cst_40 = arith.constant dense<0.000000e+00> : vector<8xf32>
    %80 = vector.multi_reduction <add>, %79, %cst_40 [1] : vector<8x32xf32> to vector<8xf32>
    %81 = vector.shape_cast %80 : vector<8xf32> to vector<8x1xf32>
    %cst_41 = arith.constant 0.0322580636 : f32
    %82 = vector.broadcast %cst_41 : f32 to vector<8x1xf32>
    %83 = arith.mulf %81, %82 : vector<8x1xf32>
    %84 = math.sqrt %83 : vector<8x1xf32>
    %85 = vector.broadcast %76 : vector<8x1xf32> to vector<8x32xf32>
    %86 = arith.subf %68, %85 : vector<8x32xf32>
    %87 = vector.broadcast %70 : vector<1x32xf32> to vector<8x32xf32>
    %88 = arith.mulf %87, %86 : vector<8x32xf32>
    %cst_42 = arith.constant 9.99999997E-7 : f32
    %89 = vector.broadcast %cst_42 : f32 to vector<8x1xf32>
    %90 = arith.addf %84, %89 : vector<8x1xf32>
    %91 = tpu.reciprocal %90 {approx = true} : vector<8x1xf32> -> vector<8x1xf32>
    %92 = vector.broadcast %91 : vector<8x1xf32> to vector<8x32xf32>
    %93 = arith.mulf %88, %92 : vector<8x32xf32>
    %94 = vector.broadcast %72 : vector<1x32xf32> to vector<8x32xf32>
    %95 = arith.addf %93, %94 : vector<8x32xf32>
    %96 = arith.truncf %95 : vector<8x32xf32> to vector<8x32xbf16>
    %c1_43 = arith.constant 1 : index
    %c0_44 = arith.constant 0 : index
    %c0_45 = arith.constant 0 : index
    %97 = vector.load %arg5[%c1_43, %c0_44, %c0_45] : memref<2x32x96xbf16, #tpu.memory_space<vmem>>, vector<1x32x96xbf16>
    %98 = vector.shape_cast %97 : vector<1x32x96xbf16> to vector<32x96xbf16>
    %cst_46 = arith.constant dense<0.000000e+00> : vector<8x96xf32>
    %99 = tpu.matmul %96, %98, %cst_46 {dimension_numbers = #tpu.dot_dimension_numbers<[1], [0], [0], [1], [0, 0, 1, 1], [], []>} : vector<8x32xbf16>, vector<32x96xbf16>, vector<8x96xf32> -> vector<8x96xf32>
    %c1_47 = arith.constant 1 : index
    %c0_48 = arith.constant 0 : index
    %c0_49 = arith.constant 0 : index
    %100 = vector.load %arg6[%c1_47, %c0_48, %c0_49] : memref<2x1x96xf32, #tpu.memory_space<vmem>>, vector<1x1x96xf32>
    %101 = vector.shape_cast %100 : vector<1x1x96xf32> to vector<1x96xf32>
    %102 = vector.broadcast %101 : vector<1x96xf32> to vector<8x96xf32>
    %103 = arith.addf %99, %102 : vector<8x96xf32>
    %104 = vector.extract_strided_slice %103 {offsets = [0, 0], sizes = [8, 32], strides = [1, 1]} : vector<8x96xf32> to vector<8x32xf32>
    %105 = vector.extract_strided_slice %103 {offsets = [0, 32], sizes = [8, 32], strides = [1, 1]} : vector<8x96xf32> to vector<8x32xf32>
    %106 = vector.extract_strided_slice %103 {offsets = [0, 64], sizes = [8, 32], strides = [1, 1]} : vector<8x96xf32> to vector<8x32xf32>
    %107 = arith.truncf %104 : vector<8x32xf32> to vector<8x32xbf16>
    %108 = arith.truncf %105 : vector<8x32xf32> to vector<8x32xbf16>
    %cst_50 = arith.constant dense<0.000000e+00> : vector<8x8xf32>
    %109 = tpu.matmul %107, %108, %cst_50 {dimension_numbers = #tpu.dot_dimension_numbers<[1], [1], [0], [0], [0, 0, 1, 0], [], []>} : vector<8x32xbf16>, vector<8x32xbf16>, vector<8x8xf32> -> vector<8x8xf32>
    %110 = vector.broadcast %3 : vector<1x8xf32> to vector<8x8xf32>
    %111 = arith.addf %109, %110 : vector<8x8xf32>
    %cst_51 = arith.constant dense<0xFF800000> : vector<8xf32>
    %112 = vector.multi_reduction <maximumf>, %111, %cst_51 [1] : vector<8x8xf32> to vector<8xf32>
    %113 = vector.shape_cast %112 : vector<8xf32> to vector<8x1xf32>
    %114 = vector.broadcast %113 : vector<8x1xf32> to vector<8x8xf32>
    %115 = arith.subf %111, %114 : vector<8x8xf32>
    %116 = math.exp %115 : vector<8x8xf32>
    %cst_52 = arith.constant dense<0.000000e+00> : vector<8xf32>
    %117 = vector.multi_reduction <add>, %116, %cst_52 [1] : vector<8x8xf32> to vector<8xf32>
    %118 = vector.shape_cast %117 : vector<8xf32> to vector<8x1xf32>
    %119 = tpu.reciprocal %118 {approx = true} : vector<8x1xf32> -> vector<8x1xf32>
    %120 = vector.broadcast %119 : vector<8x1xf32> to vector<8x8xf32>
    %121 = arith.mulf %116, %120 : vector<8x8xf32>
    %122 = arith.truncf %121 : vector<8x8xf32> to vector<8x8xbf16>
    %123 = arith.truncf %106 : vector<8x32xf32> to vector<8x32xbf16>
    %cst_53 = arith.constant dense<0.000000e+00> : vector<8x32xf32>
    %124 = tpu.matmul %122, %123, %cst_53 {dimension_numbers = #tpu.dot_dimension_numbers<[1], [0], [0], [1], [0, 0, 1, 1], [], []>} : vector<8x8xbf16>, vector<8x32xbf16>, vector<8x32xf32> -> vector<8x32xf32>
    %125 = arith.truncf %124 : vector<8x32xf32> to vector<8x32xbf16>
    %c1_54 = arith.constant 1 : index
    %c0_55 = arith.constant 0 : index
    %c0_56 = arith.constant 0 : index
    %126 = vector.load %arg7[%c1_54, %c0_55, %c0_56] : memref<2x32x32xbf16, #tpu.memory_space<vmem>>, vector<1x32x32xbf16>
    %127 = vector.shape_cast %126 : vector<1x32x32xbf16> to vector<32x32xbf16>
    %cst_57 = arith.constant dense<0.000000e+00> : vector<8x32xf32>
    %128 = tpu.matmul %125, %127, %cst_57 {dimension_numbers = #tpu.dot_dimension_numbers<[1], [0], [0], [1], [0, 0, 1, 1], [], []>} : vector<8x32xbf16>, vector<32x32xbf16>, vector<8x32xf32> -> vector<8x32xf32>
    %c1_58 = arith.constant 1 : index
    %c0_59 = arith.constant 0 : index
    %c0_60 = arith.constant 0 : index
    %129 = vector.load %arg8[%c1_58, %c0_59, %c0_60] : memref<2x1x32xf32, #tpu.memory_space<vmem>>, vector<1x1x32xf32>
    %130 = vector.shape_cast %129 : vector<1x1x32xf32> to vector<1x32xf32>
    %131 = vector.broadcast %130 : vector<1x32xf32> to vector<8x32xf32>
    %132 = arith.addf %128, %131 : vector<8x32xf32>
    %133 = arith.addf %68, %132 : vector<8x32xf32>
    %134 = arith.truncf %133 : vector<8x32xf32> to vector<8x32xbf16>
    %c0_61 = arith.constant 0 : index
    %c0_62 = arith.constant 0 : index
    %135 = vector.load %arg9[%c0_61, %c0_62] : memref<32x32xbf16, #tpu.memory_space<vmem>>, vector<32x32xbf16>
    %cst_63 = arith.constant dense<0.000000e+00> : vector<8x32xf32>
    %136 = tpu.matmul %134, %135, %cst_63 {dimension_numbers = #tpu.dot_dimension_numbers<[1], [0], [0], [1], [0, 0, 1, 1], [], []>} : vector<8x32xbf16>, vector<32x32xbf16>, vector<8x32xf32> -> vector<8x32xf32>
    %c0_64 = arith.constant 0 : index
    %c0_65 = arith.constant 0 : index
    %137 = vector.load %arg10[%c0_64, %c0_65] : memref<1x32xf32, #tpu.memory_space<vmem>>, vector<1x32xf32>
    %138 = vector.broadcast %137 : vector<1x32xf32> to vector<8x32xf32>
    %139 = arith.addf %136, %138 : vector<8x32xf32>
    %cst_66 = arith.constant 0.000000e+00 : f32
    %140 = vector.broadcast %cst_66 : f32 to vector<8x32xf32>
    %141 = arith.maximumf %139, %140 : vector<8x32xf32>
    %142 = math.absf %139 : vector<8x32xf32>
    %cst_67 = arith.constant 0.000000e+00 : f32
    %143 = vector.broadcast %cst_67 : f32 to vector<8x32xf32>
    %144 = arith.subf %143, %142 : vector<8x32xf32>
    %145 = math.exp %144 : vector<8x32xf32>
    %146 = math.log1p %145 : vector<8x32xf32>
    %147 = arith.addf %141, %146 : vector<8x32xf32>
    %148 = tpu.iota {dimensions = array<i32: 0>} : vector<8x32xi32>
    %cst_68 = arith.constant 0.000000e+00 : f32
    %149 = vector.broadcast %cst_68 : f32 to vector<8x64xf32>
    %c4_i32 = arith.constant 4 : i32
    %150 = vector.broadcast %c4_i32 : i32 to vector<8x32xi32>
    %151 = arith.cmpi sge, %148, %150 : vector<8x32xi32>
    %c4_i32_69 = arith.constant 4 : i32
    %152 = tpu.dynamic_rotate %147 by %c4_i32_69 dim 0 : vector<8x32xf32>, i32 -> vector<8x32xf32>
    %cst_70 = arith.constant 0.000000e+00 : f32
    %153 = vector.broadcast %cst_70 : f32 to vector<8x32xf32>
    %154 = arith.select %151, %152, %153 : vector<8x32xi1>, vector<8x32xf32>
    %155 = arith.truncf %154 : vector<8x32xf32> to vector<8x32xbf16>
    %c0_71 = arith.constant 0 : index
    %c0_72 = arith.constant 0 : index
    %c0_73 = arith.constant 0 : index
    %156 = vector.load %arg11[%c0_71, %c0_72, %c0_73] : memref<5x32x64xbf16, #tpu.memory_space<vmem>>, vector<1x32x64xbf16>
    %157 = vector.shape_cast %156 : vector<1x32x64xbf16> to vector<32x64xbf16>
    %cst_74 = arith.constant dense<0.000000e+00> : vector<8x64xf32>
    %158 = tpu.matmul %155, %157, %cst_74 {dimension_numbers = #tpu.dot_dimension_numbers<[1], [0], [0], [1], [0, 0, 1, 1], [], []>} : vector<8x32xbf16>, vector<32x64xbf16>, vector<8x64xf32> -> vector<8x64xf32>
    %159 = arith.addf %149, %158 : vector<8x64xf32>
    %c3_i32 = arith.constant 3 : i32
    %160 = vector.broadcast %c3_i32 : i32 to vector<8x32xi32>
    %161 = arith.cmpi sge, %148, %160 : vector<8x32xi32>
    %c3_i32_75 = arith.constant 3 : i32
    %162 = tpu.dynamic_rotate %147 by %c3_i32_75 dim 0 : vector<8x32xf32>, i32 -> vector<8x32xf32>
    %cst_76 = arith.constant 0.000000e+00 : f32
    %163 = vector.broadcast %cst_76 : f32 to vector<8x32xf32>
    %164 = arith.select %161, %162, %163 : vector<8x32xi1>, vector<8x32xf32>
    %165 = arith.truncf %164 : vector<8x32xf32> to vector<8x32xbf16>
    %c1_77 = arith.constant 1 : index
    %c0_78 = arith.constant 0 : index
    %c0_79 = arith.constant 0 : index
    %166 = vector.load %arg11[%c1_77, %c0_78, %c0_79] : memref<5x32x64xbf16, #tpu.memory_space<vmem>>, vector<1x32x64xbf16>
    %167 = vector.shape_cast %166 : vector<1x32x64xbf16> to vector<32x64xbf16>
    %cst_80 = arith.constant dense<0.000000e+00> : vector<8x64xf32>
    %168 = tpu.matmul %165, %167, %cst_80 {dimension_numbers = #tpu.dot_dimension_numbers<[1], [0], [0], [1], [0, 0, 1, 1], [], []>} : vector<8x32xbf16>, vector<32x64xbf16>, vector<8x64xf32> -> vector<8x64xf32>
    %169 = arith.addf %159, %168 : vector<8x64xf32>
    %c2_i32 = arith.constant 2 : i32
    %170 = vector.broadcast %c2_i32 : i32 to vector<8x32xi32>
    %171 = arith.cmpi sge, %148, %170 : vector<8x32xi32>
    %c2_i32_81 = arith.constant 2 : i32
    %172 = tpu.dynamic_rotate %147 by %c2_i32_81 dim 0 : vector<8x32xf32>, i32 -> vector<8x32xf32>
    %cst_82 = arith.constant 0.000000e+00 : f32
    %173 = vector.broadcast %cst_82 : f32 to vector<8x32xf32>
    %174 = arith.select %171, %172, %173 : vector<8x32xi1>, vector<8x32xf32>
    %175 = arith.truncf %174 : vector<8x32xf32> to vector<8x32xbf16>
    %c2 = arith.constant 2 : index
    %c0_83 = arith.constant 0 : index
    %c0_84 = arith.constant 0 : index
    %176 = vector.load %arg11[%c2, %c0_83, %c0_84] : memref<5x32x64xbf16, #tpu.memory_space<vmem>>, vector<1x32x64xbf16>
    %177 = vector.shape_cast %176 : vector<1x32x64xbf16> to vector<32x64xbf16>
    %cst_85 = arith.constant dense<0.000000e+00> : vector<8x64xf32>
    %178 = tpu.matmul %175, %177, %cst_85 {dimension_numbers = #tpu.dot_dimension_numbers<[1], [0], [0], [1], [0, 0, 1, 1], [], []>} : vector<8x32xbf16>, vector<32x64xbf16>, vector<8x64xf32> -> vector<8x64xf32>
    %179 = arith.addf %169, %178 : vector<8x64xf32>
    %c1_i32 = arith.constant 1 : i32
    %180 = vector.broadcast %c1_i32 : i32 to vector<8x32xi32>
    %181 = arith.cmpi sge, %148, %180 : vector<8x32xi32>
    %c1_i32_86 = arith.constant 1 : i32
    %182 = tpu.dynamic_rotate %147 by %c1_i32_86 dim 0 : vector<8x32xf32>, i32 -> vector<8x32xf32>
    %cst_87 = arith.constant 0.000000e+00 : f32
    %183 = vector.broadcast %cst_87 : f32 to vector<8x32xf32>
    %184 = arith.select %181, %182, %183 : vector<8x32xi1>, vector<8x32xf32>
    %185 = arith.truncf %184 : vector<8x32xf32> to vector<8x32xbf16>
    %c3 = arith.constant 3 : index
    %c0_88 = arith.constant 0 : index
    %c0_89 = arith.constant 0 : index
    %186 = vector.load %arg11[%c3, %c0_88, %c0_89] : memref<5x32x64xbf16, #tpu.memory_space<vmem>>, vector<1x32x64xbf16>
    %187 = vector.shape_cast %186 : vector<1x32x64xbf16> to vector<32x64xbf16>
    %cst_90 = arith.constant dense<0.000000e+00> : vector<8x64xf32>
    %188 = tpu.matmul %185, %187, %cst_90 {dimension_numbers = #tpu.dot_dimension_numbers<[1], [0], [0], [1], [0, 0, 1, 1], [], []>} : vector<8x32xbf16>, vector<32x64xbf16>, vector<8x64xf32> -> vector<8x64xf32>
    %189 = arith.addf %179, %188 : vector<8x64xf32>
    %190 = arith.truncf %147 : vector<8x32xf32> to vector<8x32xbf16>
    %c4 = arith.constant 4 : index
    %c0_91 = arith.constant 0 : index
    %c0_92 = arith.constant 0 : index
    %191 = vector.load %arg11[%c4, %c0_91, %c0_92] : memref<5x32x64xbf16, #tpu.memory_space<vmem>>, vector<1x32x64xbf16>
    %192 = vector.shape_cast %191 : vector<1x32x64xbf16> to vector<32x64xbf16>
    %cst_93 = arith.constant dense<0.000000e+00> : vector<8x64xf32>
    %193 = tpu.matmul %190, %192, %cst_93 {dimension_numbers = #tpu.dot_dimension_numbers<[1], [0], [0], [1], [0, 0, 1, 1], [], []>} : vector<8x32xbf16>, vector<32x64xbf16>, vector<8x64xf32> -> vector<8x64xf32>
    %194 = arith.addf %189, %193 : vector<8x64xf32>
    %c0_94 = arith.constant 0 : index
    %c0_95 = arith.constant 0 : index
    %195 = vector.load %arg12[%c0_94, %c0_95] : memref<1x64xf32, #tpu.memory_space<vmem>>, vector<1x64xf32>
    %196 = vector.broadcast %195 : vector<1x64xf32> to vector<8x64xf32>
    %197 = arith.addf %194, %196 : vector<8x64xf32>
    %cst_96 = arith.constant 0.000000e+00 : f32
    %198 = vector.broadcast %cst_96 : f32 to vector<8x64xf32>
    %199 = arith.maximumf %197, %198 : vector<8x64xf32>
    %200 = math.absf %197 : vector<8x64xf32>
    %cst_97 = arith.constant 0.000000e+00 : f32
    %201 = vector.broadcast %cst_97 : f32 to vector<8x64xf32>
    %202 = arith.subf %201, %200 : vector<8x64xf32>
    %203 = math.exp %202 : vector<8x64xf32>
    %204 = math.log1p %203 : vector<8x64xf32>
    %205 = arith.addf %199, %204 : vector<8x64xf32>
    %206 = arith.truncf %205 : vector<8x64xf32> to vector<8x64xbf16>
    %c0_98 = arith.constant 0 : index
    %c0_99 = arith.constant 0 : index
    %207 = vector.load %arg13[%c0_98, %c0_99] : memref<64x32xbf16, #tpu.memory_space<vmem>>, vector<64x32xbf16>
    %cst_100 = arith.constant dense<0.000000e+00> : vector<8x32xf32>
    %208 = tpu.matmul %206, %207, %cst_100 {dimension_numbers = #tpu.dot_dimension_numbers<[1], [0], [0], [1], [0, 0, 1, 1], [], []>} : vector<8x64xbf16>, vector<64x32xbf16>, vector<8x32xf32> -> vector<8x32xf32>
    %c0_101 = arith.constant 0 : index
    %c0_102 = arith.constant 0 : index
    %209 = vector.load %arg14[%c0_101, %c0_102] : memref<1x32xf32, #tpu.memory_space<vmem>>, vector<1x32xf32>
    %210 = vector.broadcast %209 : vector<1x32xf32> to vector<8x32xf32>
    %211 = arith.addf %208, %210 : vector<8x32xf32>
    %cst_103 = arith.constant 0.000000e+00 : f32
    %212 = vector.broadcast %cst_103 : f32 to vector<8x32xf32>
    %213 = arith.maximumf %211, %212 : vector<8x32xf32>
    %214 = math.absf %211 : vector<8x32xf32>
    %cst_104 = arith.constant 0.000000e+00 : f32
    %215 = vector.broadcast %cst_104 : f32 to vector<8x32xf32>
    %216 = arith.subf %215, %214 : vector<8x32xf32>
    %217 = math.exp %216 : vector<8x32xf32>
    %218 = math.log1p %217 : vector<8x32xf32>
    %219 = arith.addf %213, %218 : vector<8x32xf32>
    %220 = arith.addf %133, %219 : vector<8x32xf32>
    %221 = arith.truncf %220 : vector<8x32xf32> to vector<8x32xbf16>
    %c0_105 = arith.constant 0 : index
    %c0_106 = arith.constant 0 : index
    %222 = vector.load %arg15[%c0_105, %c0_106] : memref<32x32xbf16, #tpu.memory_space<vmem>>, vector<32x32xbf16>
    %cst_107 = arith.constant dense<0.000000e+00> : vector<8x32xf32>
    %223 = tpu.matmul %221, %222, %cst_107 {dimension_numbers = #tpu.dot_dimension_numbers<[1], [0], [0], [1], [0, 0, 1, 1], [], []>} : vector<8x32xbf16>, vector<32x32xbf16>, vector<8x32xf32> -> vector<8x32xf32>
    %c0_108 = arith.constant 0 : index
    %c0_109 = arith.constant 0 : index
    %224 = vector.load %arg16[%c0_108, %c0_109] : memref<1x32xf32, #tpu.memory_space<vmem>>, vector<1x32xf32>
    %225 = vector.broadcast %224 : vector<1x32xf32> to vector<8x32xf32>
    %226 = arith.addf %223, %225 : vector<8x32xf32>
    %c0_110 = arith.constant 0 : index
    %c0_111 = arith.constant 0 : index
    %227 = vector.load %arg17[%c0_110, %c0_111] : memref<1x32xf32, #tpu.memory_space<vmem>>, vector<1x32xf32>
    %c0_112 = arith.constant 0 : index
    %c0_113 = arith.constant 0 : index
    %228 = vector.load %arg18[%c0_112, %c0_113] : memref<1x32xf32, #tpu.memory_space<vmem>>, vector<1x32xf32>
    %cst_114 = arith.constant dense<0.000000e+00> : vector<8xf32>
    %229 = vector.multi_reduction <add>, %226, %cst_114 [1] : vector<8x32xf32> to vector<8xf32>
    %230 = vector.shape_cast %229 : vector<8xf32> to vector<8x1xf32>
    %cst_115 = arith.constant 3.200000e+01 : f32
    %231 = vector.broadcast %cst_115 : f32 to vector<8x1xf32>
    %232 = arith.divf %230, %231 : vector<8x1xf32>
    %233 = vector.broadcast %232 : vector<8x1xf32> to vector<8x32xf32>
    %234 = arith.subf %226, %233 : vector<8x32xf32>
    %235 = arith.mulf %234, %234 : vector<8x32xf32>
    %cst_116 = arith.constant dense<0.000000e+00> : vector<8xf32>
    %236 = vector.multi_reduction <add>, %235, %cst_116 [1] : vector<8x32xf32> to vector<8xf32>
    %237 = vector.shape_cast %236 : vector<8xf32> to vector<8x1xf32>
    %cst_117 = arith.constant 0.0322580636 : f32
    %238 = vector.broadcast %cst_117 : f32 to vector<8x1xf32>
    %239 = arith.mulf %237, %238 : vector<8x1xf32>
    %240 = math.sqrt %239 : vector<8x1xf32>
    %241 = vector.broadcast %232 : vector<8x1xf32> to vector<8x32xf32>
    %242 = arith.subf %226, %241 : vector<8x32xf32>
    %243 = vector.broadcast %227 : vector<1x32xf32> to vector<8x32xf32>
    %244 = arith.mulf %243, %242 : vector<8x32xf32>
    %cst_118 = arith.constant 9.99999997E-7 : f32
    %245 = vector.broadcast %cst_118 : f32 to vector<8x1xf32>
    %246 = arith.addf %240, %245 : vector<8x1xf32>
    %247 = tpu.reciprocal %246 {approx = true} : vector<8x1xf32> -> vector<8x1xf32>
    %248 = vector.broadcast %247 : vector<8x1xf32> to vector<8x32xf32>
    %249 = arith.mulf %244, %248 : vector<8x32xf32>
    %250 = vector.broadcast %228 : vector<1x32xf32> to vector<8x32xf32>
    %251 = arith.addf %249, %250 : vector<8x32xf32>
    %c0_119 = arith.constant 0 : index
    %c0_120 = arith.constant 0 : index
    %c0_121 = arith.constant 0 : index
    %252 = vector.load %arg23[%c0_119, %c0_120, %c0_121] : memref<1x8x32xf32, #tpu.memory_space<vmem>>, vector<1x8x32xf32>
    %253 = vector.shape_cast %252 : vector<1x8x32xf32> to vector<8x32xf32>
    %254 = vector.shape_cast %251 : vector<8x32xf32> to vector<1x8x32xf32>
    tpu.vector_store %arg23[%c0_119, %c0_120, %c0_121], %254 {strides = array<i32>} : memref<1x8x32xf32, #tpu.memory_space<vmem>>, vector<1x8x32xf32>,
    %255 = arith.truncf %251 : vector<8x32xf32> to vector<8x32xbf16>
    %c0_122 = arith.constant 0 : index
    %c0_123 = arith.constant 0 : index
    %256 = vector.load %arg19[%c0_122, %c0_123] : memref<32x16xbf16, #tpu.memory_space<vmem>>, vector<32x16xbf16>
    %cst_124 = arith.constant dense<0.000000e+00> : vector<8x16xf32>
    %257 = tpu.matmul %255, %256, %cst_124 {dimension_numbers = #tpu.dot_dimension_numbers<[1], [0], [0], [1], [0, 0, 1, 1], [], []>} : vector<8x32xbf16>, vector<32x16xbf16>, vector<8x16xf32> -> vector<8x16xf32>
    %c0_125 = arith.constant 0 : index
    %c0_126 = arith.constant 0 : index
    %258 = vector.load %arg20[%c0_125, %c0_126] : memref<1x16xf32, #tpu.memory_space<vmem>>, vector<1x16xf32>
    %259 = vector.broadcast %258 : vector<1x16xf32> to vector<8x16xf32>
    %260 = arith.addf %257, %259 : vector<8x16xf32>
    %c0_127 = arith.constant 0 : index
    %c0_128 = arith.constant 0 : index
    %c0_129 = arith.constant 0 : index
    %261 = vector.load %arg24[%c0_127, %c0_128, %c0_129] : memref<1x8x16xf32, #tpu.memory_space<vmem>>, vector<1x8x16xf32>
    %262 = vector.shape_cast %261 : vector<1x8x16xf32> to vector<8x16xf32>
    %263 = vector.shape_cast %260 : vector<8x16xf32> to vector<1x8x16xf32>
    tpu.vector_store %arg24[%c0_127, %c0_128, %c0_129], %263 {strides = array<i32>} : memref<1x8x16xf32, #tpu.memory_space<vmem>>, vector<1x8x16xf32>,
    %264 = math.tanh %260 : vector<8x16xf32>
    %265 = arith.truncf %264 : vector<8x16xf32> to vector<8x16xbf16>
    %c0_130 = arith.constant 0 : index
    %c0_131 = arith.constant 0 : index
    %266 = vector.load %arg21[%c0_130, %c0_131] : memref<16x128xbf16, #tpu.memory_space<vmem>>, vector<16x128xbf16>
    %cst_132 = arith.constant dense<0.000000e+00> : vector<8x128xf32>
    %267 = tpu.matmul %265, %266, %cst_132 {dimension_numbers = #tpu.dot_dimension_numbers<[1], [0], [0], [1], [0, 0, 1, 1], [], []>} : vector<8x16xbf16>, vector<16x128xbf16>, vector<8x128xf32> -> vector<8x128xf32>
    %c0_133 = arith.constant 0 : index
    %c0_134 = arith.constant 0 : index
    %268 = vector.load %arg22[%c0_133, %c0_134] : memref<1x128xf32, #tpu.memory_space<vmem>>, vector<1x128xf32>
    %269 = vector.broadcast %268 : vector<1x128xf32> to vector<8x128xf32>
    %270 = arith.addf %267, %269 : vector<8x128xf32>
    %c0_135 = arith.constant 0 : index
    %c0_136 = arith.constant 0 : index
    %c0_137 = arith.constant 0 : index
    %271 = vector.load %arg25[%c0_135, %c0_136, %c0_137] : memref<1x8x128xf32, #tpu.memory_space<vmem>>, vector<1x8x128xf32>
    %272 = vector.shape_cast %271 : vector<1x8x128xf32> to vector<8x128xf32>
    %273 = vector.shape_cast %270 : vector<8x128xf32> to vector<1x8x128xf32>
    tpu.vector_store %arg25[%c0_135, %c0_136, %c0_137], %273 {strides = array<i32>} : memref<1x8x128xf32, #tpu.memory_space<vmem>>, vector<1x8x128xf32>,
    return
  }
  func.func @transform_0(%arg0: i32) -> (i32, i32, i32) {
    %c0_i32 = arith.constant 0 : i32
    %c0_i32_0 = arith.constant 0 : i32
    %c0_i32_1 = arith.constant 0 : i32
    return %arg0, %c0_i32, %c0_i32_0 : i32, i32, i32
  }
  func.func @transform_1(%arg0: i32) -> (i32, i32, i32) {
    %c0_i32 = arith.constant 0 : i32
    %c0_i32_0 = arith.constant 0 : i32
    %c0_i32_1 = arith.constant 0 : i32
    return %arg0, %c0_i32, %c0_i32_0 : i32, i32, i32
  }
  func.func @transform_2(%arg0: i32) -> (i32, i32, i32) {
    %c0_i32 = arith.constant 0 : i32
    %c0_i32_0 = arith.constant 0 : i32
    %c0_i32_1 = arith.constant 0 : i32
    %c0_i32_2 = arith.constant 0 : i32
    return %c0_i32, %c0_i32_0, %c0_i32_1 : i32, i32, i32
  }
  func.func @transform_3(%arg0: i32) -> (i32, i32, i32) {
    %c0_i32 = arith.constant 0 : i32
    %c0_i32_0 = arith.constant 0 : i32
    %c0_i32_1 = arith.constant 0 : i32
    %c0_i32_2 = arith.constant 0 : i32
    return %c0_i32, %c0_i32_0, %c0_i32_1 : i32, i32, i32
  }
  func.func @transform_4(%arg0: i32) -> (i32, i32, i32) {
    %c0_i32 = arith.constant 0 : i32
    %c0_i32_0 = arith.constant 0 : i32
    %c0_i32_1 = arith.constant 0 : i32
    %c0_i32_2 = arith.constant 0 : i32
    return %c0_i32, %c0_i32_0, %c0_i32_1 : i32, i32, i32
  }
  func.func @transform_5(%arg0: i32) -> (i32, i32, i32) {
    %c0_i32 = arith.constant 0 : i32
    %c0_i32_0 = arith.constant 0 : i32
    %c0_i32_1 = arith.constant 0 : i32
    %c0_i32_2 = arith.constant 0 : i32
    return %c0_i32, %c0_i32_0, %c0_i32_1 : i32, i32, i32
  }
  func.func @transform_6(%arg0: i32) -> (i32, i32, i32) {
    %c0_i32 = arith.constant 0 : i32
    %c0_i32_0 = arith.constant 0 : i32
    %c0_i32_1 = arith.constant 0 : i32
    %c0_i32_2 = arith.constant 0 : i32
    return %c0_i32, %c0_i32_0, %c0_i32_1 : i32, i32, i32
  }
  func.func @transform_7(%arg0: i32) -> (i32, i32, i32) {
    %c0_i32 = arith.constant 0 : i32
    %c0_i32_0 = arith.constant 0 : i32
    %c0_i32_1 = arith.constant 0 : i32
    %c0_i32_2 = arith.constant 0 : i32
    return %c0_i32, %c0_i32_0, %c0_i32_1 : i32, i32, i32
  }
  func.func @transform_8(%arg0: i32) -> (i32, i32) {
    %c0_i32 = arith.constant 0 : i32
    %c0_i32_0 = arith.constant 0 : i32
    %c0_i32_1 = arith.constant 0 : i32
    return %c0_i32, %c0_i32_0 : i32, i32
  }
  func.func @transform_9(%arg0: i32) -> (i32, i32) {
    %c0_i32 = arith.constant 0 : i32
    %c0_i32_0 = arith.constant 0 : i32
    %c0_i32_1 = arith.constant 0 : i32
    return %c0_i32, %c0_i32_0 : i32, i32
  }
  func.func @transform_10(%arg0: i32) -> (i32, i32, i32) {
    %c0_i32 = arith.constant 0 : i32
    %c0_i32_0 = arith.constant 0 : i32
    %c0_i32_1 = arith.constant 0 : i32
    %c0_i32_2 = arith.constant 0 : i32
    return %c0_i32, %c0_i32_0, %c0_i32_1 : i32, i32, i32
  }
  func.func @transform_11(%arg0: i32) -> (i32, i32) {
    %c0_i32 = arith.constant 0 : i32
    %c0_i32_0 = arith.constant 0 : i32
    %c0_i32_1 = arith.constant 0 : i32
    return %c0_i32, %c0_i32_0 : i32, i32
  }
  func.func @transform_12(%arg0: i32) -> (i32, i32) {
    %c0_i32 = arith.constant 0 : i32
    %c0_i32_0 = arith.constant 0 : i32
    %c0_i32_1 = arith.constant 0 : i32
    return %c0_i32, %c0_i32_0 : i32, i32
  }
  func.func @transform_13(%arg0: i32) -> (i32, i32) {
    %c0_i32 = arith.constant 0 : i32
    %c0_i32_0 = arith.constant 0 : i32
    %c0_i32_1 = arith.constant 0 : i32
    return %c0_i32, %c0_i32_0 : i32, i32
  }
  func.func @transform_14(%arg0: i32) -> (i32, i32) {
    %c0_i32 = arith.constant 0 : i32
    %c0_i32_0 = arith.constant 0 : i32
    %c0_i32_1 = arith.constant 0 : i32
    return %c0_i32, %c0_i32_0 : i32, i32
  }
  func.func @transform_15(%arg0: i32) -> (i32, i32) {
    %c0_i32 = arith.constant 0 : i32
    %c0_i32_0 = arith.constant 0 : i32
    %c0_i32_1 = arith.constant 0 : i32
    return %c0_i32, %c0_i32_0 : i32, i32
  }
  func.func @transform_16(%arg0: i32) -> (i32, i32) {
    %c0_i32 = arith.constant 0 : i32
    %c0_i32_0 = arith.constant 0 : i32
    %c0_i32_1 = arith.constant 0 : i32
    return %c0_i32, %c0_i32_0 : i32, i32
  }
  func.func @transform_17(%arg0: i32) -> (i32, i32) {
    %c0_i32 = arith.constant 0 : i32
    %c0_i32_0 = arith.constant 0 : i32
    %c0_i32_1 = arith.constant 0 : i32
    return %c0_i32, %c0_i32_0 : i32, i32
  }
  func.func @transform_18(%arg0: i32) -> (i32, i32) {
    %c0_i32 = arith.constant 0 : i32
    %c0_i32_0 = arith.constant 0 : i32
    %c0_i32_1 = arith.constant 0 : i32
    return %c0_i32, %c0_i32_0 : i32, i32
  }
  func.func @transform_19(%arg0: i32) -> (i32, i32) {
    %c0_i32 = arith.constant 0 : i32
    %c0_i32_0 = arith.constant 0 : i32
    %c0_i32_1 = arith.constant 0 : i32
    return %c0_i32, %c0_i32_0 : i32, i32
  }
  func.func @transform_20(%arg0: i32) -> (i32, i32) {
    %c0_i32 = arith.constant 0 : i32
    %c0_i32_0 = arith.constant 0 : i32
    %c0_i32_1 = arith.constant 0 : i32
    return %c0_i32, %c0_i32_0 : i32, i32
  }
  func.func @transform_21(%arg0: i32) -> (i32, i32) {
    %c0_i32 = arith.constant 0 : i32
    %c0_i32_0 = arith.constant 0 : i32
    %c0_i32_1 = arith.constant 0 : i32
    return %c0_i32, %c0_i32_0 : i32, i32
  }
  func.func @transform_22(%arg0: i32) -> (i32, i32, i32) {
    %c0_i32 = arith.constant 0 : i32
    %c0_i32_0 = arith.constant 0 : i32
    %c0_i32_1 = arith.constant 0 : i32
    return %arg0, %c0_i32, %c0_i32_0 : i32, i32, i32
  }
  func.func @transform_23(%arg0: i32) -> (i32, i32, i32) {
    %c0_i32 = arith.constant 0 : i32
    %c0_i32_0 = arith.constant 0 : i32
    %c0_i32_1 = arith.constant 0 : i32
    return %arg0, %c0_i32, %c0_i32_0 : i32, i32, i32
  }
  func.func @transform_24(%arg0: i32) -> (i32, i32, i32) {
    %c0_i32 = arith.constant 0 : i32
    %c0_i32_0 = arith.constant 0 : i32
    %c0_i32_1 = arith.constant 0 : i32
    return %arg0, %c0_i32, %c0_i32_0 : i32, i32, i32
  }
}

</mosaic_0001>

<llo_original>
// kernel: model_forward.1
$region0: #{model_forward.1}
  #allocation0 [shape = 'u32[]', space=smem, size = 0x4, offset = 0x4, fixed_abs, tag = 'smem constant byte address 0x4 - core index']
  #allocation1 [shape = 'u32[72,128]{1,0:T(1,128)}', space=vmem, size = 0x9000, scoped, tag = 'internal scratch']
  %s0 = inlined_call_operand.vmem [shape: f32[2,8,32], index: 0, kind: input, shape index: {}]
  %s1 = inlined_call_operand.vmem [shape: f32[2,1,8], index: 1, kind: input, shape index: {}]
  %s2 = inlined_call_operand.vmem [shape: f32[2,1,32], index: 2, kind: input, shape index: {}]
  %s3 = inlined_call_operand.vmem [shape: f32[2,1,32], index: 3, kind: input, shape index: {}]
  %s4 = inlined_call_operand.vmem [shape: bf16[2,32,96], index: 4, kind: input, shape index: {}]
  %s5 = inlined_call_operand.vmem [shape: f32[2,1,96], index: 5, kind: input, shape index: {}]
  %s6 = inlined_call_operand.vmem [shape: bf16[2,32,32], index: 6, kind: input, shape index: {}]
  %s7 = inlined_call_operand.vmem [shape: f32[2,1,32], index: 7, kind: input, shape index: {}]
  %s8 = inlined_call_operand.vmem [shape: bf16[32,32], index: 8, kind: input, shape index: {}]
  %s9 = inlined_call_operand.vmem [shape: f32[1,32], index: 9, kind: input, shape index: {}]
  %s10 = inlined_call_operand.vmem [shape: bf16[5,32,64], index: 10, kind: input, shape index: {}]
  %s11 = inlined_call_operand.vmem [shape: f32[1,64], index: 11, kind: input, shape index: {}]
  %s12 = inlined_call_operand.vmem [shape: bf16[64,32], index: 12, kind: input, shape index: {}]
  %s13 = inlined_call_operand.vmem [shape: f32[1,32], index: 13, kind: input, shape index: {}]
  %s14 = inlined_call_operand.vmem [shape: bf16[32,32], index: 14, kind: input, shape index: {}]
  %s15 = inlined_call_operand.vmem [shape: f32[1,32], index: 15, kind: input, shape index: {}]
  %s16 = inlined_call_operand.vmem [shape: f32[1,32], index: 16, kind: input, shape index: {}]
  %s17 = inlined_call_operand.vmem [shape: f32[1,32], index: 17, kind: input, shape index: {}]
  %s18 = inlined_call_operand.vmem [shape: bf16[32,16], index: 18, kind: input, shape index: {}]
  %s19 = inlined_call_operand.vmem [shape: f32[1,16], index: 19, kind: input, shape index: {}]
  %s20 = inlined_call_operand.vmem [shape: bf16[16,128], index: 20, kind: input, shape index: {}]
  %s21 = inlined_call_operand.vmem [shape: f32[1,128], index: 21, kind: input, shape index: {}]
  %s22 = inlined_call_operand.hbm [shape: f32[2,8,32], index: 22, kind: output, shape index: {0}]
  %s23 = inlined_call_operand.hbm [shape: f32[2,8,16], index: 23, kind: output, shape index: {1}]
  %s24 = inlined_call_operand.hbm [shape: f32[2,8,128], index: 24, kind: output, shape index: {2}]
  %25 = xla_tuple %s22, %s23, %s24
  %s26 = sld [smem:[#allocation0]]
  $region137: #{model_forward.1} parent=0
    _
  %s28 = ssub.s32 1, %s26
  %s29 = scalar_select 0, %s28, %s26
  $region1: #{model_forward.1} parent=0
    #allocation2 [shape = 'u8[8192]{0}', space=vmem, size = 0x2000, scoped, tag = 'output window, operand 0']
    #allocation3 [shape = 's32[2]{0}', space=sflag, size = 0x8, scoped, tag = 'scoped memory for model_forward.1']
    #allocation4 [shape = 'u8[8192]{0}', space=vmem, size = 0x2000, scoped, tag = 'output window, operand 1']
    #allocation5 [shape = 's32[2]{0}', space=sflag, size = 0x8, scoped, tag = 'scoped memory for model_forward.1']
    #allocation6 [shape = 'u8[8192]{0}', space=vmem, size = 0x2000, scoped, tag = 'output window, operand 2']
    %30 = vsyncpa [#allocation3], 0
    %s31 = scalar_lea.sflag [#allocation3], 1
    %32 = vsyncpa %s31, 0
    %33 = vsyncpa [#allocation5], 0
    %s34 = scalar_lea.sflag [#allocation5], 1
    %35 = vsyncpa %s34, 0
    loop: start=0, step=1, limit=4
    $region2: #{model_forward.1} parent=1 // loop_pre_header
      _
    $region3: #{model_forward.1} parent=1 // loop_header
      %s37 = sphi 0, %s41
      %p38 = scmp.ge.s32.totalorder %s37, 4
      %s47 = sphi 0, %s49
      %s50 = sphi 0, %s47
      %s51 = sphi 0, %s50
      %s67 = sphi 0, %s51
      %s73 = sphi 0, %s75
      %s76 = sphi 0, %s73
      %s77 = sphi 0, %s76
      %s93 = sphi 0, %s77
      %s97 = sphi 0, %s97
      %s99 = sphi 0, %s97
      %s100 = sphi 0, %s99
      %s114 = sphi 0, %s100
      %s118 = sphi 0, %s118
      %s120 = sphi 0, %s118
      %s121 = sphi 0, %s120
      %s135 = sphi 0, %s121
      %s139 = sphi 0, %s139
      %s141 = sphi 0, %s139
      %s142 = sphi 0, %s141
      %s156 = sphi 0, %s142
      %s160 = sphi 0, %s160
      %s162 = sphi 0, %s160
      %s163 = sphi 0, %s162
      %s177 = sphi 0, %s163
      %s181 = sphi 0, %s181
      %s183 = sphi 0, %s181
      %s184 = sphi 0, %s183
      %s198 = sphi 0, %s184
      %s202 = sphi 0, %s202
      %s204 = sphi 0, %s202
      %s205 = sphi 0, %s204
      %s219 = sphi 0, %s205
      %s223 = sphi 0, %s223
      %s225 = sphi 0, %s223
      %s226 = sphi 0, %s225
      %s240 = sphi 0, %s226
      %s244 = sphi 0, %s244
      %s246 = sphi 0, %s244
      %s247 = sphi 0, %s246
      %s261 = sphi 0, %s247
      %s265 = sphi 0, %s265
      %s267 = sphi 0, %s265
      %s268 = sphi 0, %s267
      %s282 = sphi 0, %s268
      %s286 = sphi 0, %s286
      %s288 = sphi 0, %s286
      %s289 = sphi 0, %s288
      %s303 = sphi 0, %s289
      %s307 = sphi 0, %s307
      %s309 = sphi 0, %s307
      %s310 = sphi 0, %s309
      %s324 = sphi 0, %s310
      %s328 = sphi 0, %s328
      %s330 = sphi 0, %s328
      %s331 = sphi 0, %s330
      %s345 = sphi 0, %s331
      %s349 = sphi 0, %s349
      %s351 = sphi 0, %s349
      %s352 = sphi 0, %s351
      %s366 = sphi 0, %s352
      %s370 = sphi 0, %s370
      %s372 = sphi 0, %s370
      %s373 = sphi 0, %s372
      %s387 = sphi 0, %s373
      %s391 = sphi 0, %s391
      %s393 = sphi 0, %s391
      %s394 = sphi 0, %s393
      %s408 = sphi 0, %s394
      %s412 = sphi 0, %s412
      %s414 = sphi 0, %s412
      %s415 = sphi 0, %s414
      %s429 = sphi 0, %s415
      %s433 = sphi 0, %s433
      %s435 = sphi 0, %s433
      %s436 = sphi 0, %s435
      %s450 = sphi 0, %s436
      %s454 = sphi 0, %s454
      %s456 = sphi 0, %s454
      %s457 = sphi 0, %s456
      %s471 = sphi 0, %s457
      %s475 = sphi 0, %s475
      %s477 = sphi 0, %s475
      %s478 = sphi 0, %s477
      %s492 = sphi 0, %s478
      %s496 = sphi 0, %s496
      %s498 = sphi 0, %s496
      %s499 = sphi 0, %s498
      %s513 = sphi 0, %s499
      %s519 = sphi 0, %s521
      %s522 = sphi 0, %s519
      %s523 = sphi 0, %s522
      %s539 = sphi 0, %s523
      %s545 = sphi 0, %s547
      %s548 = sphi 0, %s545
      %s549 = sphi 0, %s548
      %s565 = sphi 0, %s549
      %s571 = sphi 0, %s573
      %s574 = sphi 0, %s571
      %s575 = sphi 0, %s574
      %s591 = sphi 0, %s575
    $region4: #{model_forward.1} parent=1 // loop_header_branch
      %40 = sbr.rel (%p38) target = $region8
    $region5: #{model_forward.1} parent=1 // loop_body
      %s42 = ssub.s32 %s37, 1
      %s43 = ssub.s32 %s37, 2
      %s44 = sadd.s32 %s37, 1
      %s45 = ssub.s32 %s37, %s44
      %p46 = scmp.eq.s32.totalorder %s45, 0
      %s48 = sadd.s32 %s47, 1
      %s49 = scalar_select %p46, %s47, %s48
      %p52 = pneg %p46
      %p53 = scmp.eq.s32.totalorder %s37, 1
      %p54 = por %p52, %p53
      %p55 = scmp.ne.s32.totalorder %s47, %s50
      %p56 = scmp.eq.s32.totalorder %s37, 0
      %p57 = por %p55, %p56
      %p58 = scmp.ne.s32.totalorder %s47, %s50
      %p59 = scmp.eq.s32.totalorder %s42, 1
      %p60 = por %p58, %p59
      %p61 = scmp.ne.s32.totalorder %s50, %s51
      %p62 = scmp.eq.s32.totalorder %s42, 0
      %p63 = por %p61, %p62
      %p64 = scmp.ne.s32.totalorder %s50, %s51
      %p65 = scmp.eq.s32.totalorder %s43, 1
      %p66 = por %p64, %p65
      %p68 = scmp.ne.s32.totalorder %s51, %s67
      %p69 = scmp.eq.s32.totalorder %s43, 0
      %p70 = por %p68, %p69
      %s71 = ssub.s32 %s37, %s44
      %p72 = scmp.eq.s32.totalorder %s71, 0
      %s74 = sadd.s32 %s73, 1
      %s75 = scalar_select %p72, %s73, %s74
      %p78 = pneg %p72
      %p79 = scmp.eq.s32.totalorder %s37, 1
      %p80 = por %p78, %p79
      %p81 = scmp.ne.s32.totalorder %s73, %s76
      %p82 = scmp.eq.s32.totalorder %s37, 0
      %p83 = por %p81, %p82
      %p84 = scmp.ne.s32.totalorder %s73, %s76
      %p85 = scmp.eq.s32.totalorder %s42, 1
      %p86 = por %p84, %p85
      %p87 = scmp.ne.s32.totalorder %s76, %s77
      %p88 = scmp.eq.s32.totalorder %s42, 0
      %p89 = por %p87, %p88
      %p90 = scmp.ne.s32.totalorder %s76, %s77
      %p91 = scmp.eq.s32.totalorder %s43, 1
      %p92 = por %p90, %p91
      %p94 = scmp.ne.s32.totalorder %s77, %s93
      %p95 = scmp.eq.s32.totalorder %s43, 0
      %p96 = por %p94, %p95
      %s98 = sadd.s32 %s97, 1
      %p101 = scmp.eq.s32.totalorder %s37, 1
      %p102 = scmp.ne.s32.totalorder %s97, %s99
      %p103 = scmp.eq.s32.totalorder %s37, 0
      %p104 = por %p102, %p103
      %p105 = scmp.ne.s32.totalorder %s97, %s99
      %p106 = scmp.eq.s32.totalorder %s42, 1
      %p107 = por %p105, %p106
      %p108 = scmp.ne.s32.totalorder %s99, %s100
      %p109 = scmp.eq.s32.totalorder %s42, 0
      %p110 = por %p108, %p109
      %p111 = scmp.ne.s32.totalorder %s99, %s100
      %p112 = scmp.eq.s32.totalorder %s43, 1
      %p113 = por %p111, %p112
      %p115 = scmp.ne.s32.totalorder %s100, %s114
      %p116 = scmp.eq.s32.totalorder %s43, 0
      %p117 = por %p115, %p116
      %s119 = sadd.s32 %s118, 1
      %p122 = scmp.eq.s32.totalorder %s37, 1
      %p123 = scmp.ne.s32.totalorder %s118, %s120
      %p124 = scmp.eq.s32.totalorder %s37, 0
      %p125 = por %p123, %p124
      %p126 = scmp.ne.s32.totalorder %s118, %s120
      %p127 = scmp.eq.s32.totalorder %s42, 1
      %p128 = por %p126, %p127
      %p129 = scmp.ne.s32.totalorder %s120, %s121
      %p130 = scmp.eq.s32.totalorder %s42, 0
      %p131 = por %p129, %p130
      %p132 = scmp.ne.s32.totalorder %s120, %s121
      %p133 = scmp.eq.s32.totalorder %s43, 1
      %p134 = por %p132, %p133
      %p136 = scmp.ne.s32.totalorder %s121, %s135
      %p137 = scmp.eq.s32.totalorder %s43, 0
      %p138 = por %p136, %p137
      %s140 = sadd.s32 %s139, 1
      %p143 = scmp.eq.s32.totalorder %s37, 1
      %p144 = scmp.ne.s32.totalorder %s139, %s141
      %p145 = scmp.eq.s32.totalorder %s37, 0
      %p146 = por %p144, %p145
      %p147 = scmp.ne.s32.totalorder %s139, %s141
      %p148 = scmp.eq.s32.totalorder %s42, 1
      %p149 = por %p147, %p148
      %p150 = scmp.ne.s32.totalorder %s141, %s142
      %p151 = scmp.eq.s32.totalorder %s42, 0
      %p152 = por %p150, %p151
      %p153 = scmp.ne.s32.totalorder %s141, %s142
      %p154 = scmp.eq.s32.totalorder %s43, 1
      %p155 = por %p153, %p154
      %p157 = scmp.ne.s32.totalorder %s142, %s156
      %p158 = scmp.eq.s32.totalorder %s43, 0
      %p159 = por %p157, %p158
      %s161 = sadd.s32 %s160, 1
      %p164 = scmp.eq.s32.totalorder %s37, 1
      %p165 = scmp.ne.s32.totalorder %s160, %s162
      %p166 = scmp.eq.s32.totalorder %s37, 0
      %p167 = por %p165, %p166
      %p168 = scmp.ne.s32.totalorder %s160, %s162
      %p169 = scmp.eq.s32.totalorder %s42, 1
      %p170 = por %p168, %p169
      %p171 = scmp.ne.s32.totalorder %s162, %s163
      %p172 = scmp.eq.s32.totalorder %s42, 0
      %p173 = por %p171, %p172
      %p174 = scmp.ne.s32.totalorder %s162, %s163
      %p175 = scmp.eq.s32.totalorder %s43, 1
      %p176 = por %p174, %p175
      %p178 = scmp.ne.s32.totalorder %s163, %s177
      %p179 = scmp.eq.s32.totalorder %s43, 0
      %p180 = por %p178, %p179
      %s182 = sadd.s32 %s181, 1
      %p185 = scmp.eq.s32.totalorder %s37, 1
      %p186 = scmp.ne.s32.totalorder %s181, %s183
      %p187 = scmp.eq.s32.totalorder %s37, 0
      %p188 = por %p186, %p187
      %p189 = scmp.ne.s32.totalorder %s181, %s183
      %p190 = scmp.eq.s32.totalorder %s42, 1
      %p191 = por %p189, %p190
      %p192 = scmp.ne.s32.totalorder %s183, %s184
      %p193 = scmp.eq.s32.totalorder %s42, 0
      %p194 = por %p192, %p193
      %p195 = scmp.ne.s32.totalorder %s183, %s184
      %p196 = scmp.eq.s32.totalorder %s43, 1
      %p197 = por %p195, %p196
      %p199 = scmp.ne.s32.totalorder %s184, %s198
      %p200 = scmp.eq.s32.totalorder %s43, 0
      %p201 = por %p199, %p200
      %s203 = sadd.s32 %s202, 1
      %p206 = scmp.eq.s32.totalorder %s37, 1
      %p207 = scmp.ne.s32.totalorder %s202, %s204
      %p208 = scmp.eq.s32.totalorder %s37, 0
      %p209 = por %p207, %p208
      %p210 = scmp.ne.s32.totalorder %s202, %s204
      %p211 = scmp.eq.s32.totalorder %s42, 1
      %p212 = por %p210, %p211
      %p213 = scmp.ne.s32.totalorder %s204, %s205
      %p214 = scmp.eq.s32.totalorder %s42, 0
      %p215 = por %p213, %p214
      %p216 = scmp.ne.s32.totalorder %s204, %s205
      %p217 = scmp.eq.s32.totalorder %s43, 1
      %p218 = por %p216, %p217
      %p220 = scmp.ne.s32.totalorder %s205, %s219
      %p221 = scmp.eq.s32.totalorder %s43, 0
      %p222 = por %p220, %p221
      %s224 = sadd.s32 %s223, 1
      %p227 = scmp.eq.s32.totalorder %s37, 1
      %p228 = scmp.ne.s32.totalorder %s223, %s225
      %p229 = scmp.eq.s32.totalorder %s37, 0
      %p230 = por %p228, %p229
      %p231 = scmp.ne.s32.totalorder %s223, %s225
      %p232 = scmp.eq.s32.totalorder %s42, 1
      %p233 = por %p231, %p232
      %p234 = scmp.ne.s32.totalorder %s225, %s226
      %p235 = scmp.eq.s32.totalorder %s42, 0
      %p236 = por %p234, %p235
      %p237 = scmp.ne.s32.totalorder %s225, %s226
      %p238 = scmp.eq.s32.totalorder %s43, 1
      %p239 = por %p237, %p238
      %p241 = scmp.ne.s32.totalorder %s226, %s240
      %p242 = scmp.eq.s32.totalorder %s43, 0
      %p243 = por %p241, %p242
      %s245 = sadd.s32 %s244, 1
      %p248 = scmp.eq.s32.totalorder %s37, 1
      %p249 = scmp.ne.s32.totalorder %s244, %s246
      %p250 = scmp.eq.s32.totalorder %s37, 0
      %p251 = por %p249, %p250
      %p252 = scmp.ne.s32.totalorder %s244, %s246
      %p253 = scmp.eq.s32.totalorder %s42, 1
      %p254 = por %p252, %p253
      %p255 = scmp.ne.s32.totalorder %s246, %s247
      %p256 = scmp.eq.s32.totalorder %s42, 0
      %p257 = por %p255, %p256
      %p258 = scmp.ne.s32.totalorder %s246, %s247
      %p259 = scmp.eq.s32.totalorder %s43, 1
      %p260 = por %p258, %p259
      %p262 = scmp.ne.s32.totalorder %s247, %s261
      %p263 = scmp.eq.s32.totalorder %s43, 0
      %p264 = por %p262, %p263
      %s266 = sadd.s32 %s265, 1
      %p269 = scmp.eq.s32.totalorder %s37, 1
      %p270 = scmp.ne.s32.totalorder %s265, %s267
      %p271 = scmp.eq.s32.totalorder %s37, 0
      %p272 = por %p270, %p271
      %p273 = scmp.ne.s32.totalorder %s265, %s267
      %p274 = scmp.eq.s32.totalorder %s42, 1
      %p275 = por %p273, %p274
      %p276 = scmp.ne.s32.totalorder %s267, %s268
      %p277 = scmp.eq.s32.totalorder %s42, 0
      %p278 = por %p276, %p277
      %p279 = scmp.ne.s32.totalorder %s267, %s268
      %p280 = scmp.eq.s32.totalorder %s43, 1
      %p281 = por %p279, %p280
      %p283 = scmp.ne.s32.totalorder %s268, %s282
      %p284 = scmp.eq.s32.totalorder %s43, 0
      %p285 = por %p283, %p284
      %s287 = sadd.s32 %s286, 1
      %p290 = scmp.eq.s32.totalorder %s37, 1
      %p291 = scmp.ne.s32.totalorder %s286, %s288
      %p292 = scmp.eq.s32.totalorder %s37, 0
      %p293 = por %p291, %p292
      %p294 = scmp.ne.s32.totalorder %s286, %s288
      %p295 = scmp.eq.s32.totalorder %s42, 1
      %p296 = por %p294, %p295
      %p297 = scmp.ne.s32.totalorder %s288, %s289
      %p298 = scmp.eq.s32.totalorder %s42, 0
      %p299 = por %p297, %p298
      %p300 = scmp.ne.s32.totalorder %s288, %s289
      %p301 = scmp.eq.s32.totalorder %s43, 1
      %p302 = por %p300, %p301
      %p304 = scmp.ne.s32.totalorder %s289, %s303
      %p305 = scmp.eq.s32.totalorder %s43, 0
      %p306 = por %p304, %p305
      %s308 = sadd.s32 %s307, 1
      %p311 = scmp.eq.s32.totalorder %s37, 1
      %p312 = scmp.ne.s32.totalorder %s307, %s309
      %p313 = scmp.eq.s32.totalorder %s37, 0
      %p314 = por %p312, %p313
      %p315 = scmp.ne.s32.totalorder %s307, %s309
      %p316 = scmp.eq.s32.totalorder %s42, 1
      %p317 = por %p315, %p316
      %p318 = scmp.ne.s32.totalorder %s309, %s310
      %p319 = scmp.eq.s32.totalorder %s42, 0
      %p320 = por %p318, %p319
      %p321 = scmp.ne.s32.totalorder %s309, %s310
      %p322 = scmp.eq.s32.totalorder %s43, 1
      %p323 = por %p321, %p322
      %p325 = scmp.ne.s32.totalorder %s310, %s324
      %p326 = scmp.eq.s32.totalorder %s43, 0
      %p327 = por %p325, %p326
      %s329 = sadd.s32 %s328, 1
      %p332 = scmp.eq.s32.totalorder %s37, 1
      %p333 = scmp.ne.s32.totalorder %s328, %s330
      %p334 = scmp.eq.s32.totalorder %s37, 0
      %p335 = por %p333, %p334
      %p336 = scmp.ne.s32.totalorder %s328, %s330
      %p337 = scmp.eq.s32.totalorder %s42, 1
      %p338 = por %p336, %p337
      %p339 = scmp.ne.s32.totalorder %s330, %s331
      %p340 = scmp.eq.s32.totalorder %s42, 0
      %p341 = por %p339, %p340
      %p342 = scmp.ne.s32.totalorder %s330, %s331
      %p343 = scmp.eq.s32.totalorder %s43, 1
      %p344 = por %p342, %p343
      %p346 = scmp.ne.s32.totalorder %s331, %s345
      %p347 = scmp.eq.s32.totalorder %s43, 0
      %p348 = por %p346, %p347
      %s350 = sadd.s32 %s349, 1
      %p353 = scmp.eq.s32.totalorder %s37, 1
      %p354 = scmp.ne.s32.totalorder %s349, %s351
      %p355 = scmp.eq.s32.totalorder %s37, 0
      %p356 = por %p354, %p355
      %p357 = scmp.ne.s32.totalorder %s349, %s351
      %p358 = scmp.eq.s32.totalorder %s42, 1
      %p359 = por %p357, %p358
      %p360 = scmp.ne.s32.totalorder %s351, %s352
      %p361 = scmp.eq.s32.totalorder %s42, 0
      %p362 = por %p360, %p361
      %p363 = scmp.ne.s32.totalorder %s351, %s352
      %p364 = scmp.eq.s32.totalorder %s43, 1
      %p365 = por %p363, %p364
      %p367 = scmp.ne.s32.totalorder %s352, %s366
      %p368 = scmp.eq.s32.totalorder %s43, 0
      %p369 = por %p367, %p368
      %s371 = sadd.s32 %s370, 1
      %p374 = scmp.eq.s32.totalorder %s37, 1
      %p375 = scmp.ne.s32.totalorder %s370, %s372
      %p376 = scmp.eq.s32.totalorder %s37, 0
      %p377 = por %p375, %p376
      %p378 = scmp.ne.s32.totalorder %s370, %s372
      %p379 = scmp.eq.s32.totalorder %s42, 1
      %p380 = por %p378, %p379
      %p381 = scmp.ne.s32.totalorder %s372, %s373
      %p382 = scmp.eq.s32.totalorder %s42, 0
      %p383 = por %p381, %p382
      %p384 = scmp.ne.s32.totalorder %s372, %s373
      %p385 = scmp.eq.s32.totalorder %s43, 1
      %p386 = por %p384, %p385
      %p388 = scmp.ne.s32.totalorder %s373, %s387
      %p389 = scmp.eq.s32.totalorder %s43, 0
      %p390 = por %p388, %p389
      %s392 = sadd.s32 %s391, 1
      %p395 = scmp.eq.s32.totalorder %s37, 1
      %p396 = scmp.ne.s32.totalorder %s391, %s393
      %p397 = scmp.eq.s32.totalorder %s37, 0
      %p398 = por %p396, %p397
      %p399 = scmp.ne.s32.totalorder %s391, %s393
      %p400 = scmp.eq.s32.totalorder %s42, 1
      %p401 = por %p399, %p400
      %p402 = scmp.ne.s32.totalorder %s393, %s394
      %p403 = scmp.eq.s32.totalorder %s42, 0
      %p404 = por %p402, %p403
      %p405 = scmp.ne.s32.totalorder %s393, %s394
      %p406 = scmp.eq.s32.totalorder %s43, 1
      %p407 = por %p405, %p406
      %p409 = scmp.ne.s32.totalorder %s394, %s408
      %p410 = scmp.eq.s32.totalorder %s43, 0
      %p411 = por %p409, %p410
      %s413 = sadd.s32 %s412, 1
      %p416 = scmp.eq.s32.totalorder %s37, 1
      %p417 = scmp.ne.s32.totalorder %s412, %s414
      %p418 = scmp.eq.s32.totalorder %s37, 0
      %p419 = por %p417, %p418
      %p420 = scmp.ne.s32.totalorder %s412, %s414
      %p421 = scmp.eq.s32.totalorder %s42, 1
      %p422 = por %p420, %p421
      %p423 = scmp.ne.s32.totalorder %s414, %s415
      %p424 = scmp.eq.s32.totalorder %s42, 0
      %p425 = por %p423, %p424
      %p426 = scmp.ne.s32.totalorder %s414, %s415
      %p427 = scmp.eq.s32.totalorder %s43, 1
      %p428 = por %p426, %p427
      %p430 = scmp.ne.s32.totalorder %s415, %s429
      %p431 = scmp.eq.s32.totalorder %s43, 0
      %p432 = por %p430, %p431
      %s434 = sadd.s32 %s433, 1
      %p437 = scmp.eq.s32.totalorder %s37, 1
      %p438 = scmp.ne.s32.totalorder %s433, %s435
      %p439 = scmp.eq.s32.totalorder %s37, 0
      %p440 = por %p438, %p439
      %p441 = scmp.ne.s32.totalorder %s433, %s435
      %p442 = scmp.eq.s32.totalorder %s42, 1
      %p443 = por %p441, %p442
      %p444 = scmp.ne.s32.totalorder %s435, %s436
      %p445 = scmp.eq.s32.totalorder %s42, 0
      %p446 = por %p444, %p445
      %p447 = scmp.ne.s32.totalorder %s435, %s436
      %p448 = scmp.eq.s32.totalorder %s43, 1
      %p449 = por %p447, %p448
      %p451 = scmp.ne.s32.totalorder %s436, %s450
      %p452 = scmp.eq.s32.totalorder %s43, 0
      %p453 = por %p451, %p452
      %s455 = sadd.s32 %s454, 1
      %p458 = scmp.eq.s32.totalorder %s37, 1
      %p459 = scmp.ne.s32.totalorder %s454, %s456
      %p460 = scmp.eq.s32.totalorder %s37, 0
      %p461 = por %p459, %p460
      %p462 = scmp.ne.s32.totalorder %s454, %s456
      %p463 = scmp.eq.s32.totalorder %s42, 1
      %p464 = por %p462, %p463
      %p465 = scmp.ne.s32.totalorder %s456, %s457
      %p466 = scmp.eq.s32.totalorder %s42, 0
      %p467 = por %p465, %p466
      %p468 = scmp.ne.s32.totalorder %s456, %s457
      %p469 = scmp.eq.s32.totalorder %s43, 1
      %p470 = por %p468, %p469
      %p472 = scmp.ne.s32.totalorder %s457, %s471
      %p473 = scmp.eq.s32.totalorder %s43, 0
      %p474 = por %p472, %p473
      %s476 = sadd.s32 %s475, 1
      %p479 = scmp.eq.s32.totalorder %s37, 1
      %p480 = scmp.ne.s32.totalorder %s475, %s477
      %p481 = scmp.eq.s32.totalorder %s37, 0
      %p482 = por %p480, %p481
      %p483 = scmp.ne.s32.totalorder %s475, %s477
      %p484 = scmp.eq.s32.totalorder %s42, 1
      %p485 = por %p483, %p484
      %p486 = scmp.ne.s32.totalorder %s477, %s478
      %p487 = scmp.eq.s32.totalorder %s42, 0
      %p488 = por %p486, %p487
      %p489 = scmp.ne.s32.totalorder %s477, %s478
      %p490 = scmp.eq.s32.totalorder %s43, 1
      %p491 = por %p489, %p490
      %p493 = scmp.ne.s32.totalorder %s478, %s492
      %p494 = scmp.eq.s32.totalorder %s43, 0
      %p495 = por %p493, %p494
      %s497 = sadd.s32 %s496, 1
      %p500 = scmp.eq.s32.totalorder %s37, 1
      %p501 = scmp.ne.s32.totalorder %s496, %s498
      %p502 = scmp.eq.s32.totalorder %s37, 0
      %p503 = por %p501, %p502
      %p504 = scmp.ne.s32.totalorder %s496, %s498
      %p505 = scmp.eq.s32.totalorder %s42, 1
      %p506 = por %p504, %p505
      %p507 = scmp.ne.s32.totalorder %s498, %s499
      %p508 = scmp.eq.s32.totalorder %s42, 0
      %p509 = por %p507, %p508
      %p510 = scmp.ne.s32.totalorder %s498, %s499
      %p511 = scmp.eq.s32.totalorder %s43, 1
      %p512 = por %p510, %p511
      %p514 = scmp.ne.s32.totalorder %s499, %s513
      %p515 = scmp.eq.s32.totalorder %s43, 0
      %p516 = por %p514, %p515
      %s517 = ssub.s32 %s37, %s44
      %p518 = scmp.eq.s32.totalorder %s517, 0
      %s520 = sadd.s32 %s519, 1
      %s521 = scalar_select %p518, %s519, %s520
      %p524 = pneg %p518
      %p525 = scmp.eq.s32.totalorder %s37, 1
      %p526 = por %p524, %p525
      %p527 = scmp.ne.s32.totalorder %s519, %s522
      %p528 = scmp.eq.s32.totalorder %s37, 0
      %p529 = por %p527, %p528
      %p530 = scmp.ne.s32.totalorder %s519, %s522
      %p531 = scmp.eq.s32.totalorder %s42, 1
      %p532 = por %p530, %p531
      %p533 = scmp.ne.s32.totalorder %s522, %s523
      %p534 = scmp.eq.s32.totalorder %s42, 0
      %p535 = por %p533, %p534
      %p536 = scmp.ne.s32.totalorder %s522, %s523
      %p537 = scmp.eq.s32.totalorder %s43, 1
      %p538 = por %p536, %p537
      %p540 = scmp.ne.s32.totalorder %s523, %s539
      %p541 = scmp.eq.s32.totalorder %s43, 0
      %p542 = por %p540, %p541
      %s543 = ssub.s32 %s37, %s44
      %p544 = scmp.eq.s32.totalorder %s543, 0
      %s546 = sadd.s32 %s545, 1
      %s547 = scalar_select %p544, %s545, %s546
      %p550 = pneg %p544
      %p551 = scmp.eq.s32.totalorder %s37, 1
      %p552 = por %p550, %p551
      %p553 = scmp.ne.s32.totalorder %s545, %s548
      %p554 = scmp.eq.s32.totalorder %s37, 0
      %p555 = por %p553, %p554
      %p556 = scmp.ne.s32.totalorder %s545, %s548
      %p557 = scmp.eq.s32.totalorder %s42, 1
      %p558 = por %p556, %p557
      %p559 = scmp.ne.s32.totalorder %s548, %s549
      %p560 = scmp.eq.s32.totalorder %s42, 0
      %p561 = por %p559, %p560
      %p562 = scmp.ne.s32.totalorder %s548, %s549
      %p563 = scmp.eq.s32.totalorder %s43, 1
      %p564 = por %p562, %p563
      %p566 = scmp.ne.s32.totalorder %s549, %s565
      %p567 = scmp.eq.s32.totalorder %s43, 0
      %p568 = por %p566, %p567
      %s569 = ssub.s32 %s37, %s44
      %p570 = scmp.eq.s32.totalorder %s569, 0
      %s572 = sadd.s32 %s571, 1
      %s573 = scalar_select %p570, %s571, %s572
      %p576 = pneg %p570
      %p577 = scmp.eq.s32.totalorder %s37, 1
      %p578 = por %p576, %p577
      %p579 = scmp.ne.s32.totalorder %s571, %s574
      %p580 = scmp.eq.s32.totalorder %s37, 0
      %p581 = por %p579, %p580
      %p582 = scmp.ne.s32.totalorder %s571, %s574
      %p583 = scmp.eq.s32.totalorder %s42, 1
      %p584 = por %p582, %p583
      %p585 = scmp.ne.s32.totalorder %s574, %s575
      %p586 = scmp.eq.s32.totalorder %s42, 0
      %p587 = por %p585, %p586
      %p588 = scmp.ne.s32.totalorder %s574, %s575
      %p589 = scmp.eq.s32.totalorder %s43, 1
      %p590 = por %p588, %p589
      %p592 = scmp.ne.s32.totalorder %s575, %s591
      %p593 = scmp.eq.s32.totalorder %s43, 0
      %p594 = por %p592, %p593
      %p595 = scmp.le.s32.totalorder 1, %s37
      %p596 = scmp.lt.s32.totalorder %s37, 3
      %p597 = pnand %p595, %p596
      %p598 = pneg %p597
      // Predicated region
      $region9: #{model_forward.1} parent=5 // pred_check
        _
      $region10: #{model_forward.1} parent=5 // pred_check_branch
        %600 = sbr.rel (%p597) target = $region12
      $region11: #{model_forward.1} parent=5 // pred_region
        %s601 = ssub.s32 %s37, 1
        // Predicated region
        $region13: #{model_forward.1} parent=11 // pred_check
          %p602 = pneg %p110
        $region14: #{model_forward.1} parent=11 // pred_check_branch
          %604 = sbr.rel (%p602) target = $region16
        $region15: #{model_forward.1} parent=11 // pred_region
          _
        $region16: #{model_forward.1} parent=11 // pred_fallthru
          _
        // Predicated region
        $region17: #{model_forward.1} parent=11 // pred_check
          %p605 = pneg %p131
        $region18: #{model_forward.1} parent=11 // pred_check_branch
          %607 = sbr.rel (%p605) target = $region20
        $region19: #{model_forward.1} parent=11 // pred_region
          _
        $region20: #{model_forward.1} parent=11 // pred_fallthru
          _
        // Predicated region
        $region21: #{model_forward.1} parent=11 // pred_check
          %p608 = pneg %p152
        $region22: #{model_forward.1} parent=11 // pred_check_branch
          %610 = sbr.rel (%p608) target = $region24
        $region23: #{model_forward.1} parent=11 // pred_region
          _
        $region24: #{model_forward.1} parent=11 // pred_fallthru
          _
        // Predicated region
        $region25: #{model_forward.1} parent=11 // pred_check
          %p611 = pneg %p173
        $region26: #{model_forward.1} parent=11 // pred_check_branch
          %613 = sbr.rel (%p611) target = $region28
        $region27: #{model_forward.1} parent=11 // pred_region
          _
        $region28: #{model_forward.1} parent=11 // pred_fallthru
          _
        // Predicated region
        $region29: #{model_forward.1} parent=11 // pred_check
          %p614 = pneg %p194
        $region30: #{model_forward.1} parent=11 // pred_check_branch
          %616 = sbr.rel (%p614) target = $region32
        $region31: #{model_forward.1} parent=11 // pred_region
          _
        $region32: #{model_forward.1} parent=11 // pred_fallthru
          _
        // Predicated region
        $region33: #{model_forward.1} parent=11 // pred_check
          %p617 = pneg %p215
        $region34: #{model_forward.1} parent=11 // pred_check_branch
          %619 = sbr.rel (%p617) target = $region36
        $region35: #{model_forward.1} parent=11 // pred_region
          _
        $region36: #{model_forward.1} parent=11 // pred_fallthru
          _
        // Predicated region
        $region37: #{model_forward.1} parent=11 // pred_check
          %p620 = pneg %p236
        $region38: #{model_forward.1} parent=11 // pred_check_branch
          %622 = sbr.rel (%p620) target = $region40
        $region39: #{model_forward.1} parent=11 // pred_region
          _
        $region40: #{model_forward.1} parent=11 // pred_fallthru
          _
        // Predicated region
        $region41: #{model_forward.1} parent=11 // pred_check
          %p623 = pneg %p257
        $region42: #{model_forward.1} parent=11 // pred_check_branch
          %625 = sbr.rel (%p623) target = $region44
        $region43: #{model_forward.1} parent=11 // pred_region
          _
        $region44: #{model_forward.1} parent=11 // pred_fallthru
          _
        // Predicated region
        $region45: #{model_forward.1} parent=11 // pred_check
          %p626 = pneg %p278
        $region46: #{model_forward.1} parent=11 // pred_check_branch
          %628 = sbr.rel (%p626) target = $region48
        $region47: #{model_forward.1} parent=11 // pred_region
          _
        $region48: #{model_forward.1} parent=11 // pred_fallthru
          _
        // Predicated region
        $region49: #{model_forward.1} parent=11 // pred_check
          %p629 = pneg %p299
        $region50: #{model_forward.1} parent=11 // pred_check_branch
          %631 = sbr.rel (%p629) target = $region52
        $region51: #{model_forward.1} parent=11 // pred_region
          _
        $region52: #{model_forward.1} parent=11 // pred_fallthru
          _
        // Predicated region
        $region53: #{model_forward.1} parent=11 // pred_check
          %p632 = pneg %p320
        $region54: #{model_forward.1} parent=11 // pred_check_branch
          %634 = sbr.rel (%p632) target = $region56
        $region55: #{model_forward.1} parent=11 // pred_region
          _
        $region56: #{model_forward.1} parent=11 // pred_fallthru
          _
        // Predicated region
        $region57: #{model_forward.1} parent=11 // pred_check
          %p635 = pneg %p341
        $region58: #{model_forward.1} parent=11 // pred_check_branch
          %637 = sbr.rel (%p635) target = $region60
        $region59: #{model_forward.1} parent=11 // pred_region
          _
        $region60: #{model_forward.1} parent=11 // pred_fallthru
          _
        // Predicated region
        $region61: #{model_forward.1} parent=11 // pred_check
          %p638 = pneg %p362
        $region62: #{model_forward.1} parent=11 // pred_check_branch
          %640 = sbr.rel (%p638) target = $region64
        $region63: #{model_forward.1} parent=11 // pred_region
          _
        $region64: #{model_forward.1} parent=11 // pred_fallthru
          _
        // Predicated region
        $region65: #{model_forward.1} parent=11 // pred_check
          %p641 = pneg %p383
        $region66: #{model_forward.1} parent=11 // pred_check_branch
          %643 = sbr.rel (%p641) target = $region68
        $region67: #{model_forward.1} parent=11 // pred_region
          _
        $region68: #{model_forward.1} parent=11 // pred_fallthru
          _
        // Predicated region
        $region69: #{model_forward.1} parent=11 // pred_check
          %p644 = pneg %p404
        $region70: #{model_forward.1} parent=11 // pred_check_branch
          %646 = sbr.rel (%p644) target = $region72
        $region71: #{model_forward.1} parent=11 // pred_region
          _
        $region72: #{model_forward.1} parent=11 // pred_fallthru
          _
        // Predicated region
        $region73: #{model_forward.1} parent=11 // pred_check
          %p647 = pneg %p425
        $region74: #{model_forward.1} parent=11 // pred_check_branch
          %649 = sbr.rel (%p647) target = $region76
        $region75: #{model_forward.1} parent=11 // pred_region
          _
        $region76: #{model_forward.1} parent=11 // pred_fallthru
          _
        // Predicated region
        $region77: #{model_forward.1} parent=11 // pred_check
          %p650 = pneg %p446
        $region78: #{model_forward.1} parent=11 // pred_check_branch
          %652 = sbr.rel (%p650) target = $region80
        $region79: #{model_forward.1} parent=11 // pred_region
          _
        $region80: #{model_forward.1} parent=11 // pred_fallthru
          _
        // Predicated region
        $region81: #{model_forward.1} parent=11 // pred_check
          %p653 = pneg %p467
        $region82: #{model_forward.1} parent=11 // pred_check_branch
          %655 = sbr.rel (%p653) target = $region84
        $region83: #{model_forward.1} parent=11 // pred_region
          _
        $region84: #{model_forward.1} parent=11 // pred_fallthru
          _
        // Predicated region
        $region85: #{model_forward.1} parent=11 // pred_check
          %p656 = pneg %p488
        $region86: #{model_forward.1} parent=11 // pred_check_branch
          %658 = sbr.rel (%p656) target = $region88
        $region87: #{model_forward.1} parent=11 // pred_region
          _
        $region88: #{model_forward.1} parent=11 // pred_fallthru
          _
        // Predicated region
        $region89: #{model_forward.1} parent=11 // pred_check
          %p659 = pneg %p509
        $region90: #{model_forward.1} parent=11 // pred_check_branch
          %661 = sbr.rel (%p659) target = $region92
        $region91: #{model_forward.1} parent=11 // pred_region
          _
        $region92: #{model_forward.1} parent=11 // pred_fallthru
          _
      $region12: #{model_forward.1} parent=5 // pred_fallthru
        _
      %p662 = scmp.lt.s32.totalorder %s37, 2
      // Predicated region
      $region93: #{model_forward.1} parent=5 // pred_check
        %p663 = pneg %p662
      $region94: #{model_forward.1} parent=5 // pred_check_branch
        %665 = sbr.rel (%p663) target = $region96
      $region95: #{model_forward.1} parent=5 // pred_region
        // Predicated region
        $region97: #{model_forward.1} parent=95 // pred_check
          %p666 = pneg %p57
        $region98: #{model_forward.1} parent=95 // pred_check_branch
          %668 = sbr.rel (%p666) target = $region100
        $region99: #{model_forward.1} parent=95 // pred_region
          %p669 = scmp.lt.s32.totalorder %s37, 1
          %s670 = scalar_select %p669, %s37, 1
          %s671 = smul.addr %s670, 8
          %s672 = scalar_lea.vmem %s0, %s671
        $region100: #{model_forward.1} parent=95 // pred_fallthru
          _
        // Predicated region
        $region101: #{model_forward.1} parent=95 // pred_check
          %p673 = pneg %p83
        $region102: #{model_forward.1} parent=95 // pred_check_branch
          %675 = sbr.rel (%p673) target = $region104
        $region103: #{model_forward.1} parent=95 // pred_region
          %p676 = scmp.lt.s32.totalorder %s37, 1
          %s677 = scalar_select %p676, %s37, 1
          %s678 = scalar_lea.vmem %s1, %s677
        $region104: #{model_forward.1} parent=95 // pred_fallthru
          _
      $region96: #{model_forward.1} parent=5 // pred_fallthru
        _
      %p679 = scmp.le.s32.totalorder 1, %s37
      %p680 = scmp.lt.s32.totalorder %s37, 3
      %p681 = pnand %p679, %p680
      %p682 = pneg %p681
      // Predicated region
      $region105: #{model_forward.1} parent=5 // pred_check
        _
      $region106: #{model_forward.1} parent=5 // pred_check_branch
        %684 = sbr.rel (%p681) target = $region108
      $region107: #{model_forward.1} parent=5 // pred_region
        %s685 = ssub.s32 %s37, 1
        %p686 = scmp.lt.s32.totalorder %s42, 1
        %s687 = scalar_select %p686, %s42, 1
        %s688 = smul.addr %s687, 8
        %s689 = scalar_lea.vmem %s0, %s688
        %p690 = pneg %p63
        %p691 = pneg %p60
        %p692 = scmp.lt.s32.totalorder %s42, 1
        %s693 = scalar_select %p692, %s42, 1
        %s694 = scalar_lea.vmem %s1, %s693
        %p695 = pneg %p89
        %p696 = pneg %p86
        %p697 = pneg %p110
        %p698 = pneg %p107
        %p699 = pneg %p131
        %p700 = pneg %p128
        %p701 = pneg %p152
        %p702 = pneg %p149
        %p703 = pneg %p173
        %p704 = pneg %p170
        %p705 = pneg %p194
        %p706 = pneg %p191
        %p707 = pneg %p215
        %p708 = pneg %p212
        %p709 = pneg %p236
        %p710 = pneg %p233
        %p711 = pneg %p257
        %p712 = pneg %p254
        %p713 = pneg %p278
        %p714 = pneg %p275
        %p715 = pneg %p299
        %p716 = pneg %p296
        %p717 = pneg %p320
        %p718 = pneg %p317
        %p719 = pneg %p341
        %p720 = pneg %p338
        %p721 = pneg %p362
        %p722 = pneg %p359
        %p723 = pneg %p383
        %p724 = pneg %p380
        %p725 = pneg %p404
        %p726 = pneg %p401
        %p727 = pneg %p425
        %p728 = pneg %p422
        %p729 = pneg %p446
        %p730 = pneg %p443
        %p731 = pneg %p467
        %p732 = pneg %p464
        %p733 = pneg %p488
        %p734 = pneg %p485
        %p735 = pneg %p509
        %p736 = pneg %p506
        %p737 = pneg %p535
        %p738 = pneg %p532
        %s739 = sand.u32 %s522, 1
        %s740 = scalar_lea.sflag [#allocation3], %s739
        %s741 = sand.u32 %s522, 1
        %s742 = smul.addr %s741, 8
        %s743 = scalar_lea.vmem [#allocation2], %s742
        %p744 = pneg %p561
        %p745 = pneg %p558
        %s746 = sand.u32 %s42, 1
        %s747 = scalar_lea.sflag [#allocation5], %s746
        %s748 = sand.u32 %s548, 1
        %s749 = smul.addr %s748, 8
        %s750 = scalar_lea.vmem [#allocation4], %s749
        %p751 = pneg %p587
        %p752 = pneg %p584
        %s753 = sand.u32 %s42, 1
        %s754 = scalar_lea.sflag [#allocation5], %s753
        %s755 = sand.u32 %s574, 1
        %s756 = smul.addr %s755, 8
        %s757 = scalar_lea.vmem [#allocation6], %s756
        %p758 = scmp.lt.s32.totalorder %s42, 1
        %s759 = scalar_select %p758, %s42, 1
        %s760 = smul.addr %s759, 8
        %s761 = scalar_lea.vmem %s0, %s760
        %p762 = scmp.lt.s32.totalorder %s42, 1
        %s763 = scalar_select %p762, %s42, 1
        %s764 = scalar_lea.vmem %s1, %s763
        %v766 = vld [vmem:[%s761] sm:$0xff]
        %v767 = vld [vmem:[%s764] sm:$0x1]
        %v768 = vld [vmem:[%s2] sm:$0x1]
        %v769 = vld [vmem:[%s3] sm:$0x1]
        %vm770 = vcmask 261120
        %v771 = vsel %vm770, %v766, 0.0
        %772 = vadd.xlane.f32.xlu0 %v771
        %v773 = vpop.xlane.xlu0 %772
        %v774 = vrcp.pop 32.0
        %v775 = vmul.f32 32.0, %v774
        %v776 = vsub.f32 1.0, %v775
        %v777 = vmul.f32 %v774, %v776
        %v778 = vadd.f32 %v774, %v777
        %vm779 = vweird.f32 %v774
        %v780 = vsel %vm779, %v774, %v778
        %v781 = vmul.f32 %v773, %v780
        %v782 = vsub.f32 %v766, %v781
        %v783 = vmul.f32 %v782, %v782
        %v784 = vsel %vm770, %v783, 0.0
        %785 = vadd.xlane.f32.xlu0 %v784
        %v786 = vpop.xlane.xlu0 %785
        %v787 = vmul.f32 %v786, 0.032258064
        %v788 = vrsqrt.pop %v787
        %v789 = vmul.f32 %v788, %v787
        %v790 = vmul.f32 %v789, %v788
        %v791 = vmul.f32 0.5, %v790
        %v792 = vsub.f32 1.5, %v791
        %v793 = vmul.f32 %v788, %v792
        %v794 = vmul.f32 %v787, %v793
        %vm795 = vcmp.eq.f32.partialorder %v787, inf
        %v796 = vsel %vm795, %v787, %v794
        %vm797 = vcmp.eq.f32.partialorder %v787, 0.0
        %v798 = vand.u32 %v787, 2147483648
        %v799 = vsel %vm797, %v798, %v796
        %v801 = vperm.slane %v768, 0
        %v803 = vmul.f32 %v801, %v782
        %v804 = vadd.f32 %v799, 1e-06
        %v805 = vrcp.pop %v804
        %v806 = vmul.f32 %v803, %v805
        %v808 = vperm.slane %v769, 0
        %v810 = vadd.f32 %v806, %v808
        %v811 = vpack.c.bf16 %v810, %v810
        %v812 = vld [vmem:[%s4] sm:$0xf]
        %v813 = vld [vmem:[%s4 + $0x4] sm:$0xf]
        %v814 = vld [vmem:[%s4 + $0x8] sm:$0xf]
        %v815 = vld [vmem:[%s4 + $0xc] sm:$0xf]
        %v816 = vld [vmem:[%s5] sm:$0x1]
        %v818 = vperm.slane %v816, 0
        %v824 = vunpack.c.l.b16 %v812
        %v825 = vunpack.c.l.b16 %v813
        %v826 = vunpack.c.l.b16 %v814
        %v827 = vunpack.c.l.b16 %v815
        %v828 = vpack.c.b16 %v825, %v824
        %v829 = vpack.c.b16 %v827, %v826
        %v833 = vsel %vm770, %v811, 0
        %835 = vmatpush.bf16.msra.mxu0 0
        %836 = vmatpush.bf16.msra.mxu0 0
        %837 = vmatpush.bf16.msra.mxu0 0
        %838 = vmatpush.bf16.msra.mxu0 0
        %839 = vmatpush.bf16.msra.mxu0 0
        %840 = vmatpush.bf16.msra.mxu0 0
        %841 = vmatpush.bf16.msra.mxu0 %v829
        %842 = vmatpush.bf16.msra.mxu0 %v828
        %843 = vmatmul.bf16.gmra.mxu0 %v833
        %v844 = vpop.f32.mrf.mxu0
        %v845 = vadd.f32 %v818, %v844
        %v846 = vpop.f32.mrf.mxu0
        %847 = vdwg.mxu0
        %v848 = vpack.c.bf16 %v845, %v845
        %v850 = vperm.slane %v767, 0
        %853 = vrot.lane.b32.xlu0 %v848, 96
        %v854 = vpop.permute.xlu0 %853
        %v856 = vsel %vm770, %v848, 0
        %v859 = vsel %vm770, %v854, 0
        %861 = vmatpush.bf16.xpose.msra.mxu0 0
        %862 = vmatpush.bf16.xpose.msra.mxu0 0
        %863 = vmatpush.bf16.xpose.msra.mxu0 0
        %864 = vmatpush.bf16.xpose.msra.mxu0 0
        %865 = vmatpush.bf16.xpose.msra.mxu0 0
        %866 = vmatpush.bf16.xpose.msra.mxu0 0
        %867 = vmatpush.bf16.xpose.msra.mxu0 0
        %868 = vmatpush.bf16.xpose.msra.mxu0 %v859
        %869 = vmatmul.bf16.gmra.mxu0 %v856
        %v870 = vpop.f32.mrf.mxu0
        %v871 = vadd.f32 %v850, %v870
        %v872 = vpop.f32.mrf.mxu0
        %873 = vdwg.mxu0
        %vm874 = vcmask 64512
        %v875 = vsel %vm874, %v871, -inf
        %876 = vmax.xlane.f32.xlu0 %v875
        %v877 = vpop.xlane.xlu0 %876
        %v878 = vsub.f32 %v871, %v877
        %v879 = vmul.f32 %v878, 1.442695
        %v880 = vpow.pop %v879
        %v881 = vsel %vm874, %v880, 0.0
        %882 = vadd.xlane.f32.xlu0 %v881
        %v883 = vpop.xlane.xlu0 %882
        %v884 = vrcp.pop %v883
        %v885 = vmul.f32 %v880, %v884
        %v886 = vpack.c.bf16 %v885, %v885
        %887 = vrot.lane.b32.xlu0 %v848, 64
        %v888 = vpop.permute.xlu0 %887
        %v890 = vsel %vm874, %v886, 0
        %vm892 = vcmask 1043456
        %v894 = vsel %vm892, %v888, 0
        %896 = vmatpush.bf16.msra.mxu0 0
        %897 = vmatpush.bf16.msra.mxu0 0
        %898 = vmatpush.bf16.msra.mxu0 0
        %899 = vmatpush.bf16.msra.mxu0 0
        %900 = vmatpush.bf16.msra.mxu0 0
        %901 = vmatpush.bf16.msra.mxu0 0
        %902 = vmatpush.bf16.msra.mxu0 0
        %903 = vmatpush.bf16.msra.mxu0 %v894
        %904 = vmatmul.bf16.gmra.mxu0 %v890
        %v905 = vpop.f32.mrf.mxu0
        %v906 = vadd.f32 0.0, %v905
        %v907 = vpop.f32.mrf.mxu0
        %908 = vdwg.mxu0
        %v909 = vpack.c.bf16 %v906, %v906
        %v910 = vld [vmem:[%s6] sm:$0xf]
        %v911 = vld [vmem:[%s6 + $0x4] sm:$0xf]
        %v912 = vld [vmem:[%s6 + $0x8] sm:$0xf]
        %v913 = vld [vmem:[%s6 + $0xc] sm:$0xf]
        %v914 = vld [vmem:[%s7] sm:$0x1]
        %v916 = vperm.slane %v914, 0
        %v922 = vunpack.c.l.b16 %v910
        %v923 = vunpack.c.l.b16 %v911
        %v924 = vunpack.c.l.b16 %v912
        %v925 = vunpack.c.l.b16 %v913
        %v926 = vpack.c.b16 %v923, %v922
        %v927 = vpack.c.b16 %v925, %v924
        %v931 = vsel %vm770, %v909, 0
        %933 = vmatpush.bf16.msra.mxu0 0
        %934 = vmatpush.bf16.msra.mxu0 0
        %935 = vmatpush.bf16.msra.mxu0 0
        %936 = vmatpush.bf16.msra.mxu0 0
        %937 = vmatpush.bf16.msra.mxu0 0
        %938 = vmatpush.bf16.msra.mxu0 0
        %939 = vmatpush.bf16.msra.mxu0 %v927
        %940 = vmatpush.bf16.msra.mxu0 %v926
        %941 = vmatmul.bf16.gmra.mxu0 %v931
        %v942 = vpop.f32.mrf.mxu0
        %v943 = vadd.f32 %v916, %v942
        %v944 = vpop.f32.mrf.mxu0
        %945 = vdwg.mxu0
        %v946 = vadd.f32 %v766, %v943
        %s947 = scalar_lea.vmem %s2, 1
        %v948 = vld [vmem:[%s947] sm:$0x1]
        %s949 = scalar_lea.vmem %s3, 1
        %v950 = vld [vmem:[%s949] sm:$0x1]
        %v951 = vsel %vm770, %v946, 0.0
        %952 = vadd.xlane.f32.xlu0 %v951
        %v953 = vpop.xlane.xlu0 %952
        %v954 = vmul.f32 %v953, %v780
        %v955 = vsub.f32 %v946, %v954
        %v956 = vmul.f32 %v955, %v955
        %v957 = vsel %vm770, %v956, 0.0
        %958 = vadd.xlane.f32.xlu0 %v957
        %v959 = vpop.xlane.xlu0 %958
        %v960 = vmul.f32 %v959, 0.032258064
        %v961 = vrsqrt.pop %v960
        %v962 = vmul.f32 %v961, %v960
        %v963 = vmul.f32 %v962, %v961
        %v964 = vmul.f32 0.5, %v963
        %v965 = vsub.f32 1.5, %v964
        %v966 = vmul.f32 %v961, %v965
        %v967 = vmul.f32 %v960, %v966
        %vm968 = vcmp.eq.f32.partialorder %v960, inf
        %v969 = vsel %vm968, %v960, %v967
        %vm970 = vcmp.eq.f32.partialorder %v960, 0.0
        %v971 = vand.u32 %v960, 2147483648
        %v972 = vsel %vm970, %v971, %v969
        %v974 = vperm.slane %v948, 0
        %v976 = vmul.f32 %v974, %v955
        %v977 = vadd.f32 %v972, 1e-06
        %v978 = vrcp.pop %v977
        %v979 = vmul.f32 %v976, %v978
        %v981 = vperm.slane %v950, 0
        %v983 = vadd.f32 %v979, %v981
        %v984 = vpack.c.bf16 %v983, %v983
        %s985 = scalar_lea.vmem %s4, 16
        %v986 = vld [vmem:[%s985] sm:$0xf]
        %v987 = vld [vmem:[%s985 + $0x4] sm:$0xf]
        %v988 = vld [vmem:[%s985 + $0x8] sm:$0xf]
        %v989 = vld [vmem:[%s985 + $0xc] sm:$0xf]
        %s990 = scalar_lea.vmem %s5, 1
        %v991 = vld [vmem:[%s990] sm:$0x1]
        %v993 = vperm.slane %v991, 0
        %v999 = vunpack.c.l.b16 %v986
        %v1000 = vunpack.c.l.b16 %v987
        %v1001 = vunpack.c.l.b16 %v988
        %v1002 = vunpack.c.l.b16 %v989
        %v1003 = vpack.c.b16 %v1000, %v999
        %v1004 = vpack.c.b16 %v1002, %v1001
        %v1008 = vsel %vm770, %v984, 0
        %1010 = vmatpush.bf16.msra.mxu0 0
        %1011 = vmatpush.bf16.msra.mxu0 0
        %1012 = vmatpush.bf16.msra.mxu0 0
        %1013 = vmatpush.bf16.msra.mxu0 0
        %1014 = vmatpush.bf16.msra.mxu0 0
        %1015 = vmatpush.bf16.msra.mxu0 0
        %1016 = vmatpush.bf16.msra.mxu0 %v1004
        %1017 = vmatpush.bf16.msra.mxu0 %v1003
        %1018 = vmatmul.bf16.gmra.mxu0 %v1008
        %v1019 = vpop.f32.mrf.mxu0
        %v1020 = vadd.f32 %v993, %v1019
        %v1021 = vpop.f32.mrf.mxu0
        %1022 = vdwg.mxu0
        %v1023 = vpack.c.bf16 %v1020, %v1020
        %1025 = vrot.lane.b32.xlu0 %v1023, 96
        %v1026 = vpop.permute.xlu0 %1025
        %v1028 = vsel %vm770, %v1023, 0
        %v1031 = vsel %vm770, %v1026, 0
        %1033 = vmatpush.bf16.xpose.msra.mxu0 0
        %1034 = vmatpush.bf16.xpose.msra.mxu0 0
        %1035 = vmatpush.bf16.xpose.msra.mxu0 0
        %1036 = vmatpush.bf16.xpose.msra.mxu0 0
        %1037 = vmatpush.bf16.xpose.msra.mxu0 0
        %1038 = vmatpush.bf16.xpose.msra.mxu0 0
        %1039 = vmatpush.bf16.xpose.msra.mxu0 0
        %1040 = vmatpush.bf16.xpose.msra.mxu0 %v1031
        %1041 = vmatmul.bf16.gmra.mxu0 %v1028
        %v1042 = vpop.f32.mrf.mxu0
        %v1043 = vadd.f32 %v850, %v1042
        %v1044 = vpop.f32.mrf.mxu0
        %1045 = vdwg.mxu0
        %v1046 = vsel %vm874, %v1043, -inf
        %1047 = vmax.xlane.f32.xlu0 %v1046
        %v1048 = vpop.xlane.xlu0 %1047
        %v1049 = vsub.f32 %v1043, %v1048
        %v1050 = vmul.f32 %v1049, 1.442695
        %v1051 = vpow.pop %v1050
        %v1052 = vsel %vm874, %v1051, 0.0
        %1053 = vadd.xlane.f32.xlu0 %v1052
        %v1054 = vpop.xlane.xlu0 %1053
        %v1055 = vrcp.pop %v1054
        %v1056 = vmul.f32 %v1051, %v1055
        %v1057 = vpack.c.bf16 %v1056, %v1056
        %1058 = vrot.lane.b32.xlu0 %v1023, 64
        %v1059 = vpop.permute.xlu0 %1058
        %v1061 = vsel %vm874, %v1057, 0
        %v1064 = vsel %vm892, %v1059, 0
        %1066 = vmatpush.bf16.msra.mxu0 0
        %1067 = vmatpush.bf16.msra.mxu0 0
        %1068 = vmatpush.bf16.msra.mxu0 0
        %1069 = vmatpush.bf16.msra.mxu0 0
        %1070 = vmatpush.bf16.msra.mxu0 0
        %1071 = vmatpush.bf16.msra.mxu0 0
        %1072 = vmatpush.bf16.msra.mxu0 0
        %1073 = vmatpush.bf16.msra.mxu0 %v1064
        %1074 = vmatmul.bf16.gmra.mxu0 %v1061
        %v1075 = vpop.f32.mrf.mxu0
        %v1076 = vadd.f32 0.0, %v1075
        %v1077 = vpop.f32.mrf.mxu0
        %1078 = vdwg.mxu0
        %v1079 = vpack.c.bf16 %v1076, %v1076
        %s1080 = scalar_lea.vmem %s6, 16
        %v1081 = vld [vmem:[%s1080] sm:$0xf]
        %v1082 = vld [vmem:[%s1080 + $0x4] sm:$0xf]
        %v1083 = vld [vmem:[%s1080 + $0x8] sm:$0xf]
        %v1084 = vld [vmem:[%s1080 + $0xc] sm:$0xf]
        %s1085 = scalar_lea.vmem %s7, 1
        %v1086 = vld [vmem:[%s1085] sm:$0x1]
        %v1088 = vperm.slane %v1086, 0
        %v1094 = vunpack.c.l.b16 %v1081
        %v1095 = vunpack.c.l.b16 %v1082
        %v1096 = vunpack.c.l.b16 %v1083
        %v1097 = vunpack.c.l.b16 %v1084
        %v1098 = vpack.c.b16 %v1095, %v1094
        %v1099 = vpack.c.b16 %v1097, %v1096
        %v1103 = vsel %vm770, %v1079, 0
        %1105 = vmatpush.bf16.msra.mxu0 0
        %1106 = vmatpush.bf16.msra.mxu0 0
        %1107 = vmatpush.bf16.msra.mxu0 0
        %1108 = vmatpush.bf16.msra.mxu0 0
        %1109 = vmatpush.bf16.msra.mxu0 0
        %1110 = vmatpush.bf16.msra.mxu0 0
        %1111 = vmatpush.bf16.msra.mxu0 %v1099
        %1112 = vmatpush.bf16.msra.mxu0 %v1098
        %1113 = vmatmul.bf16.gmra.mxu0 %v1103
        %v1114 = vpop.f32.mrf.mxu0
        %v1115 = vadd.f32 %v1088, %v1114
        %v1116 = vpop.f32.mrf.mxu0
        %1117 = vdwg.mxu0
        %v1118 = vadd.f32 %v946, %v1115
        %v1119 = vpack.c.bf16 %v1118, %v1118
        %v1120 = vld [vmem:[%s8] sm:$0xf]
        %v1121 = vld [vmem:[%s8 + $0x4] sm:$0xf]
        %v1122 = vld [vmem:[%s8 + $0x8] sm:$0xf]
        %v1123 = vld [vmem:[%s8 + $0xc] sm:$0xf]
        %v1124 = vld [vmem:[%s9] sm:$0x1]
        %v1126 = vperm.slane %v1124, 0
        %v1132 = vunpack.c.l.b16 %v1120
        %v1133 = vunpack.c.l.b16 %v1121
        %v1134 = vunpack.c.l.b16 %v1122
        %v1135 = vunpack.c.l.b16 %v1123
        %v1136 = vpack.c.b16 %v1133, %v1132
        %v1137 = vpack.c.b16 %v1135, %v1134
        %v1141 = vsel %vm770, %v1119, 0
        %1143 = vmatpush.bf16.msra.mxu0 0
        %1144 = vmatpush.bf16.msra.mxu0 0
        %1145 = vmatpush.bf16.msra.mxu0 0
        %1146 = vmatpush.bf16.msra.mxu0 0
        %1147 = vmatpush.bf16.msra.mxu0 0
        %1148 = vmatpush.bf16.msra.mxu0 0
        %1149 = vmatpush.bf16.msra.mxu0 %v1137
        %1150 = vmatpush.bf16.msra.mxu0 %v1136
        %1151 = vmatmul.bf16.gmra.mxu0 %v1141
        %v1152 = vpop.f32.mrf.mxu0
        %v1153 = vadd.f32 %v1126, %v1152
        %v1154 = vpop.f32.mrf.mxu0
        %1155 = vdwg.mxu0
        %v1156 = vmax.f32 %v1153, 0.0
        %v1157 = vand.u32 2147483647, %v1153
        %v1158 = vsub.f32 0.0, %v1157
        %v1159 = vmul.f32 %v1158, 1.442695
        %v1160 = vpow.pop %v1159
        %v1161 = vadd.f32 %v1160, 1.0
        %v1162 = vlog2.pop %v1161
        %v1163 = vmul.f32 %v1162, 0.6931472
        %v1164 = vmul.f32 -0.5, %v1160
        %v1165 = vadd.f32 %v1164, 1.0
        %v1166 = vmul.f32 %v1165, %v1160
        %v1167 = vand.u32 2147483647, %v1160
        %vm1168 = vcmp.lt.f32.partialorder %v1167, 0.0004427343
        %v1169 = vsel %vm1168, %v1166, %v1163
        %v1170 = vadd.f32 %v1156, %v1169
        %v1171 = vlaneseq
        %v1172 = vshrl.u32 %v1171, 7
        %vm1173 = vcmp.ge.s32.totalorder %v1172, 4
        %v1174 = vrot.slane %v1170, 4
        %v1175 = vsel %vm1173, %v1174, 0.0
        %v1176 = vpack.c.bf16 %v1175, %v1175
        %v1177 = vld [vmem:[%s10] sm:$0xf]
        %v1178 = vld [vmem:[%s10 + $0x4] sm:$0xf]
        %v1179 = vld [vmem:[%s10 + $0x8] sm:$0xf]
        %v1180 = vld [vmem:[%s10 + $0xc] sm:$0xf]
        %vm1181 = vcmp.ge.s32.totalorder %v1172, 3
        %v1182 = vrot.slane %v1170, 5
        %v1183 = vsel %vm1181, %v1182, 0.0
        %v1184 = vpack.c.bf16 %v1183, %v1183
        %s1185 = scalar_lea.vmem %s10, 16
        %v1186 = vld [vmem:[%s1185] sm:$0xf]
        %v1187 = vld [vmem:[%s1185 + $0x4] sm:$0xf]
        %v1188 = vld [vmem:[%s1185 + $0x8] sm:$0xf]
        %v1189 = vld [vmem:[%s1185 + $0xc] sm:$0xf]
        %v1194 = vunpack.c.l.b16 %v1186
        %v1195 = vunpack.c.l.b16 %v1187
        %v1196 = vunpack.c.l.b16 %v1188
        %v1197 = vunpack.c.l.b16 %v1189
        %v1198 = vpack.c.b16 %v1195, %v1194
        %v1199 = vpack.c.b16 %v1197, %v1196
        %v1203 = vsel %vm770, %v1184, 0
        %1205 = vmatpush.bf16.msra.mxu0 0
        %1206 = vmatpush.bf16.msra.mxu0 0
        %1207 = vmatpush.bf16.msra.mxu0 0
        %1208 = vmatpush.bf16.msra.mxu0 0
        %1209 = vmatpush.bf16.msra.mxu0 0
        %1210 = vmatpush.bf16.msra.mxu0 0
        %1211 = vmatpush.bf16.msra.mxu0 %v1199
        %1212 = vmatpush.bf16.msra.mxu0 %v1198
        %1213 = vmatmul.bf16.gmra.mxu0 %v1203
        %v1214 = vpop.f32.mrf.mxu0
        %v1215 = vadd.f32 0.0, %v1214
        %v1216 = vpop.f32.mrf.mxu0
        %1217 = vdwg.mxu0
        %v1222 = vunpack.c.l.b16 %v1177
        %v1223 = vunpack.c.l.b16 %v1178
        %v1224 = vunpack.c.l.b16 %v1179
        %v1225 = vunpack.c.l.b16 %v1180
        %v1226 = vpack.c.b16 %v1223, %v1222
        %v1227 = vpack.c.b16 %v1225, %v1224
        %v1231 = vsel %vm770, %v1176, 0
        %1233 = vmatpush.bf16.msra.mxu0 0
        %1234 = vmatpush.bf16.msra.mxu0 0
        %1235 = vmatpush.bf16.msra.mxu0 0
        %1236 = vmatpush.bf16.msra.mxu0 0
        %1237 = vmatpush.bf16.msra.mxu0 0
        %1238 = vmatpush.bf16.msra.mxu0 0
        %1239 = vmatpush.bf16.msra.mxu0 %v1227
        %1240 = vmatpush.bf16.msra.mxu0 %v1226
        %1241 = vmatmul.bf16.gmra.mxu0 %v1231
        %v1242 = vpop.f32.mrf.mxu0
        %v1243 = vadd.f32 %v1215, %v1242
        %v1244 = vpop.f32.mrf.mxu0
        %1245 = vdwg.mxu0
        %vm1246 = vcmp.ge.s32.totalorder %v1172, 2
        %v1247 = vrot.slane %v1170, 6
        %v1248 = vsel %vm1246, %v1247, 0.0
        %v1249 = vpack.c.bf16 %v1248, %v1248
        %s1250 = scalar_lea.vmem %s10, 32
        %v1251 = vld [vmem:[%s1250] sm:$0xf]
        %v1252 = vld [vmem:[%s1250 + $0x4] sm:$0xf]
        %v1253 = vld [vmem:[%s1250 + $0x8] sm:$0xf]
        %v1254 = vld [vmem:[%s1250 + $0xc] sm:$0xf]
        %v1259 = vunpack.c.l.b16 %v1251
        %v1260 = vunpack.c.l.b16 %v1252
        %v1261 = vunpack.c.l.b16 %v1253
        %v1262 = vunpack.c.l.b16 %v1254
        %v1263 = vpack.c.b16 %v1260, %v1259
        %v1264 = vpack.c.b16 %v1262, %v1261
        %v1268 = vsel %vm770, %v1249, 0
        %1270 = vmatpush.bf16.msra.mxu0 0
        %1271 = vmatpush.bf16.msra.mxu0 0
        %1272 = vmatpush.bf16.msra.mxu0 0
        %1273 = vmatpush.bf16.msra.mxu0 0
        %1274 = vmatpush.bf16.msra.mxu0 0
        %1275 = vmatpush.bf16.msra.mxu0 0
        %1276 = vmatpush.bf16.msra.mxu0 %v1264
        %1277 = vmatpush.bf16.msra.mxu0 %v1263
        %1278 = vmatmul.bf16.gmra.mxu0 %v1268
        %v1279 = vpop.f32.mrf.mxu0
        %v1280 = vadd.f32 0.0, %v1279
        %v1281 = vpop.f32.mrf.mxu0
        %1282 = vdwg.mxu0
        %v1283 = vadd.f32 %v1243, %v1280
        %vm1284 = vcmp.ge.s32.totalorder %v1172, 1
        %v1285 = vrot.slane %v1170, 7
        %v1286 = vsel %vm1284, %v1285, 0.0
        %v1287 = vpack.c.bf16 %v1286, %v1286
        %s1288 = scalar_lea.vmem %s10, 48
        %v1289 = vld [vmem:[%s1288] sm:$0xf]
        %v1290 = vld [vmem:[%s1288 + $0x4] sm:$0xf]
        %v1291 = vld [vmem:[%s1288 + $0x8] sm:$0xf]
        %v1292 = vld [vmem:[%s1288 + $0xc] sm:$0xf]
        %v1297 = vunpack.c.l.b16 %v1289
        %v1298 = vunpack.c.l.b16 %v1290
        %v1299 = vunpack.c.l.b16 %v1291
        %v1300 = vunpack.c.l.b16 %v1292
        %v1301 = vpack.c.b16 %v1298, %v1297
        %v1302 = vpack.c.b16 %v1300, %v1299
        %v1306 = vsel %vm770, %v1287, 0
        %1308 = vmatpush.bf16.msra.mxu0 0
        %1309 = vmatpush.bf16.msra.mxu0 0
        %1310 = vmatpush.bf16.msra.mxu0 0
        %1311 = vmatpush.bf16.msra.mxu0 0
        %1312 = vmatpush.bf16.msra.mxu0 0
        %1313 = vmatpush.bf16.msra.mxu0 0
        %1314 = vmatpush.bf16.msra.mxu0 %v1302
        %1315 = vmatpush.bf16.msra.mxu0 %v1301
        %1316 = vmatmul.bf16.gmra.mxu0 %v1306
        %v1317 = vpop.f32.mrf.mxu0
        %v1318 = vadd.f32 0.0, %v1317
        %v1319 = vpop.f32.mrf.mxu0
        %1320 = vdwg.mxu0
        %v1321 = vadd.f32 %v1283, %v1318
        %v1322 = vpack.c.bf16 %v1170, %v1170
        %s1323 = scalar_lea.vmem %s10, 64
        %v1324 = vld [vmem:[%s1323] sm:$0xf]
        %v1325 = vld [vmem:[%s1323 + $0x4] sm:$0xf]
        %v1326 = vld [vmem:[%s1323 + $0x8] sm:$0xf]
        %v1327 = vld [vmem:[%s1323 + $0xc] sm:$0xf]
        %v1332 = vunpack.c.l.b16 %v1324
        %v1333 = vunpack.c.l.b16 %v1325
        %v1334 = vunpack.c.l.b16 %v1326
        %v1335 = vunpack.c.l.b16 %v1327
        %v1336 = vpack.c.b16 %v1333, %v1332
        %v1337 = vpack.c.b16 %v1335, %v1334
        %v1341 = vsel %vm770, %v1322, 0
        %1343 = vmatpush.bf16.msra.mxu0 0
        %1344 = vmatpush.bf16.msra.mxu0 0
        %1345 = vmatpush.bf16.msra.mxu0 0
        %1346 = vmatpush.bf16.msra.mxu0 0
        %1347 = vmatpush.bf16.msra.mxu0 0
        %1348 = vmatpush.bf16.msra.mxu0 0
        %1349 = vmatpush.bf16.msra.mxu0 %v1337
        %1350 = vmatpush.bf16.msra.mxu0 %v1336
        %1351 = vmatmul.bf16.gmra.mxu0 %v1341
        %v1352 = vpop.f32.mrf.mxu0
        %v1353 = vadd.f32 0.0, %v1352
        %v1354 = vpop.f32.mrf.mxu0
        %1355 = vdwg.mxu0
        %v1356 = vadd.f32 %v1321, %v1353
        %v1357 = vld [vmem:[%s11] sm:$0x1]
        %v1359 = vperm.slane %v1357, 0
        %v1361 = vadd.f32 %v1356, %v1359
        %v1362 = vmax.f32 %v1361, 0.0
        %v1363 = vand.u32 2147483647, %v1361
        %v1364 = vsub.f32 0.0, %v1363
        %v1365 = vmul.f32 %v1364, 1.442695
        %v1366 = vpow.pop %v1365
        %v1367 = vadd.f32 %v1366, 1.0
        %v1368 = vlog2.pop %v1367
        %v1369 = vmul.f32 %v1368, 0.6931472
        %v1370 = vmul.f32 -0.5, %v1366
        %v1371 = vadd.f32 %v1370, 1.0
        %v1372 = vmul.f32 %v1371, %v1366
        %v1373 = vand.u32 2147483647, %v1366
        %vm1374 = vcmp.lt.f32.partialorder %v1373, 0.0004427343
        %v1375 = vsel %vm1374, %v1372, %v1369
        %v1376 = vadd.f32 %v1362, %v1375
        %v1377 = vpack.c.bf16 %v1376, %v1376
        %v1378 = vld [vmem:[%s12] sm:$0xf]
        %v1379 = vld [vmem:[%s12 + $0x4] sm:$0xf]
        %v1380 = vld [vmem:[%s12 + $0x8] sm:$0xf]
        %v1381 = vld [vmem:[%s12 + $0xc] sm:$0xf]
        %v1382 = vld [vmem:[%s12 + $0x10] sm:$0xf]
        %v1383 = vld [vmem:[%s12 + $0x14] sm:$0xf]
        %v1384 = vld [vmem:[%s12 + $0x18] sm:$0xf]
        %v1385 = vld [vmem:[%s12 + $0x1c] sm:$0xf]
        %v1386 = vld [vmem:[%s13] sm:$0x1]
        %v1388 = vperm.slane %v1386, 0
        %v1398 = vunpack.c.l.b16 %v1378
        %v1399 = vunpack.c.l.b16 %v1379
        %v1400 = vunpack.c.l.b16 %v1380
        %v1401 = vunpack.c.l.b16 %v1381
        %v1402 = vunpack.c.l.b16 %v1382
        %v1403 = vunpack.c.l.b16 %v1383
        %v1404 = vunpack.c.l.b16 %v1384
        %v1405 = vunpack.c.l.b16 %v1385
        %v1406 = vpack.c.b16 %v1399, %v1398
        %v1407 = vpack.c.b16 %v1401, %v1400
        %v1408 = vpack.c.b16 %v1403, %v1402
        %v1409 = vpack.c.b16 %v1405, %v1404
        %vm1414 = vcmask 523264
        %v1416 = vsel %vm1414, %v1377, 0
        %1418 = vmatpush.bf16.msra.mxu0 0
        %1419 = vmatpush.bf16.msra.mxu0 0
        %1420 = vmatpush.bf16.msra.mxu0 0
        %1421 = vmatpush.bf16.msra.mxu0 0
        %1422 = vmatpush.bf16.msra.mxu0 %v1409
        %1423 = vmatpush.bf16.msra.mxu0 %v1408
        %1424 = vmatpush.bf16.msra.mxu0 %v1407
        %1425 = vmatpush.bf16.msra.mxu0 %v1406
        %1426 = vmatmul.bf16.gmra.mxu0 %v1416
        %v1427 = vpop.f32.mrf.mxu0
        %v1428 = vadd.f32 %v1388, %v1427
        %v1429 = vpop.f32.mrf.mxu0
        %1430 = vdwg.mxu0
        %v1431 = vmax.f32 %v1428, 0.0
        %v1432 = vand.u32 2147483647, %v1428
        %v1433 = vsub.f32 0.0, %v1432
        %v1434 = vmul.f32 %v1433, 1.442695
        %v1435 = vpow.pop %v1434
        %v1436 = vadd.f32 %v1435, 1.0
        %v1437 = vlog2.pop %v1436
        %v1438 = vmul.f32 %v1437, 0.6931472
        %v1439 = vmul.f32 -0.5, %v1435
        %v1440 = vadd.f32 %v1439, 1.0
        %v1441 = vmul.f32 %v1440, %v1435
        %v1442 = vand.u32 2147483647, %v1435
        %vm1443 = vcmp.lt.f32.partialorder %v1442, 0.0004427343
        %v1444 = vsel %vm1443, %v1441, %v1438
        %v1445 = vadd.f32 %v1431, %v1444
        %v1446 = vadd.f32 %v1118, %v1445
        %v1447 = vpack.c.bf16 %v1446, %v1446
        %v1448 = vld [vmem:[%s14] sm:$0xf]
        %v1449 = vld [vmem:[%s14 + $0x4] sm:$0xf]
        %v1450 = vld [vmem:[%s14 + $0x8] sm:$0xf]
        %v1451 = vld [vmem:[%s14 + $0xc] sm:$0xf]
        %v1452 = vld [vmem:[%s15] sm:$0x1]
        %v1454 = vperm.slane %v1452, 0
        %v1460 = vunpack.c.l.b16 %v1448
        %v1461 = vunpack.c.l.b16 %v1449
        %v1462 = vunpack.c.l.b16 %v1450
        %v1463 = vunpack.c.l.b16 %v1451
        %v1464 = vpack.c.b16 %v1461, %v1460
        %v1465 = vpack.c.b16 %v1463, %v1462
        %v1469 = vsel %vm770, %v1447, 0
        %1471 = vmatpush.bf16.msra.mxu0 0
        %1472 = vmatpush.bf16.msra.mxu0 0
        %1473 = vmatpush.bf16.msra.mxu0 0
        %1474 = vmatpush.bf16.msra.mxu0 0
        %1475 = vmatpush.bf16.msra.mxu0 0
        %1476 = vmatpush.bf16.msra.mxu0 0
        %1477 = vmatpush.bf16.msra.mxu0 %v1465
        %1478 = vmatpush.bf16.msra.mxu0 %v1464
        %1479 = vmatmul.bf16.gmra.mxu0 %v1469
        %v1480 = vpop.f32.mrf.mxu0
        %v1481 = vadd.f32 %v1454, %v1480
        %v1482 = vpop.f32.mrf.mxu0
        %1483 = vdwg.mxu0
        %v1484 = vld [vmem:[%s16] sm:$0x1]
        %v1485 = vld [vmem:[%s17] sm:$0x1]
        %v1486 = vsel %vm770, %v1481, 0.0
        %1487 = vadd.xlane.f32.xlu0 %v1486
        %v1488 = vpop.xlane.xlu0 %1487
        %v1489 = vmul.f32 %v1488, %v780
        %v1490 = vsub.f32 %v1481, %v1489
        %v1491 = vmul.f32 %v1490, %v1490
        %v1492 = vsel %vm770, %v1491, 0.0
        %1493 = vadd.xlane.f32.xlu0 %v1492
        %v1494 = vpop.xlane.xlu0 %1493
        %v1495 = vmul.f32 %v1494, 0.032258064
        %v1496 = vrsqrt.pop %v1495
        %v1497 = vmul.f32 %v1496, %v1495
        %v1498 = vmul.f32 %v1497, %v1496
        %v1499 = vmul.f32 0.5, %v1498
        %v1500 = vsub.f32 1.5, %v1499
        %v1501 = vmul.f32 %v1496, %v1500
        %v1502 = vmul.f32 %v1495, %v1501
        %vm1503 = vcmp.eq.f32.partialorder %v1495, inf
        %v1504 = vsel %vm1503, %v1495, %v1502
        %vm1505 = vcmp.eq.f32.partialorder %v1495, 0.0
        %v1506 = vand.u32 %v1495, 2147483648
        %v1507 = vsel %vm1505, %v1506, %v1504
        %v1509 = vperm.slane %v1484, 0
        %v1511 = vmul.f32 %v1509, %v1490
        %v1512 = vadd.f32 %v1507, 1e-06
        %v1513 = vrcp.pop %v1512
        %v1514 = vmul.f32 %v1511, %v1513
        %v1516 = vperm.slane %v1485, 0
        %v1518 = vadd.f32 %v1514, %v1516
        %1519 = vst.msk [vmem:[%s743] sm:$0xff] %vm770, %v1518
        %v1520 = vpack.c.bf16 %v1518, %v1518
        %v1521 = vld [vmem:[%s18] sm:$0xf]
        %v1522 = vld [vmem:[%s18 + $0x4] sm:$0xf]
        %v1523 = vld [vmem:[%s18 + $0x8] sm:$0xf]
        %v1524 = vld [vmem:[%s18 + $0xc] sm:$0xf]
        %v1525 = vld [vmem:[%s19] sm:$0x1]
        %v1527 = vperm.slane %v1525, 0
        %v1533 = vunpack.c.l.b16 %v1521
        %v1534 = vunpack.c.l.b16 %v1522
        %v1535 = vunpack.c.l.b16 %v1523
        %v1536 = vunpack.c.l.b16 %v1524
        %v1537 = vpack.c.b16 %v1534, %v1533
        %v1538 = vpack.c.b16 %v1536, %v1535
        %v1542 = vsel %vm770, %v1520, 0
        %1544 = vmatpush.bf16.msra.mxu0 0
        %1545 = vmatpush.bf16.msra.mxu0 0
        %1546 = vmatpush.bf16.msra.mxu0 0
        %1547 = vmatpush.bf16.msra.mxu0 0
        %1548 = vmatpush.bf16.msra.mxu0 0
        %1549 = vmatpush.bf16.msra.mxu0 0
        %1550 = vmatpush.bf16.msra.mxu0 %v1538
        %1551 = vmatpush.bf16.msra.mxu0 %v1537
        %1552 = vmatmul.bf16.gmra.mxu0 %v1542
        %v1553 = vpop.f32.mrf.mxu0
        %v1554 = vadd.f32 %v1527, %v1553
        %v1555 = vpop.f32.mrf.mxu0
        %1556 = vdwg.mxu0
        %vm1557 = vcmask 130048
        %1558 = vst.msk [vmem:[%s750] sm:$0xff] %vm1557, %v1554
        %v1559 = vtanh.pop %v1554
        %v1560 = vpack.c.bf16 %v1559, %v1559
        %v1561 = vld [vmem:[%s20] sm:$0xf]
        %v1562 = vld [vmem:[%s20 + $0x4] sm:$0xf]
        %v1563 = vld [vmem:[%s21] sm:$0x1]
        %v1565 = vperm.slane %v1563, 0
        %v1569 = vunpack.c.l.b16 %v1561
        %v1570 = vunpack.c.l.b16 %v1562
        %v1571 = vpack.c.b16 %v1570, %v1569
        %v1574 = vsel %vm1557, %v1560, 0
        %1576 = vmatpush.bf16.msra.mxu0 0
        %1577 = vmatpush.bf16.msra.mxu0 0
        %1578 = vmatpush.bf16.msra.mxu0 0
        %1579 = vmatpush.bf16.msra.mxu0 0
        %1580 = vmatpush.bf16.msra.mxu0 0
        %1581 = vmatpush.bf16.msra.mxu0 0
        %1582 = vmatpush.bf16.msra.mxu0 0
        %1583 = vmatpush.bf16.msra.mxu0 %v1571
        %1584 = vmatmul.bf16.gmra.mxu0 %v1574
        %v1585 = vpop.f32.mrf.mxu0
        %v1586 = vadd.f32 %v1565, %v1585
        %v1587 = vpop.f32.mrf.mxu0
        %1588 = vdwg.mxu0
        %1589 = vst [vmem:[%s757] sm:$0xff] %v1586
        %s1590 = sand.u32 %s522, 1
        %s1591 = scalar_lea.sflag [#allocation3], %s1590
        %s1592 = sand.u32 %s522, 1
        %s1593 = smul.addr %s1592, 8
        %s1594 = scalar_lea.vmem [#allocation2], %s1593
        %s1595 = sand.u32 %s42, 1
        %s1596 = scalar_lea.sflag [#allocation5], %s1595
        %s1597 = sand.u32 %s548, 1
        %s1598 = smul.addr %s1597, 8
        %s1599 = scalar_lea.vmem [#allocation4], %s1598
        %s1600 = sand.u32 %s42, 1
        %s1601 = scalar_lea.sflag [#allocation5], %s1600
        %s1602 = sand.u32 %s574, 1
        %s1603 = smul.addr %s1602, 8
        %s1604 = scalar_lea.vmem [#allocation6], %s1603
        // Predicated region
        $region109: #{model_forward.1} parent=107 // pred_check
          %p1605 = pneg %p532
        $region110: #{model_forward.1} parent=107 // pred_check_branch
          %1607 = sbr.rel (%p1605) target = $region112
        $region111: #{model_forward.1} parent=107 // pred_region
          %1609 = vsyncadd %s1591, 0
          %s1610 = smul.addr %s42, 8
          %s1611 = scalar_lea.hbm %s22, %s1610
          %s1613 = sshll.u32 %s1594, 4
          %s1614 = int_to_ptr.vmem [resolvable:$true] %s1613
          %s1615 = sshll.u32 %s1611, 4
          %s1616 = int_to_ptr.hbm [resolvable:$true] %s1615
          %1618 = dma.vmem_to_hbm [thread:$0]  %s1614, 128, %s1616, %s1591
        $region112: #{model_forward.1} parent=107 // pred_fallthru
          _
        // Predicated region
        $region113: #{model_forward.1} parent=107 // pred_check
          %p1619 = pneg %p558
        $region114: #{model_forward.1} parent=107 // pred_check_branch
          %1621 = sbr.rel (%p1619) target = $region116
        $region115: #{model_forward.1} parent=107 // pred_region
          %1623 = vsyncadd %s1596, 0
          %s1624 = smul.addr %s42, 8
          %s1625 = scalar_lea.hbm %s23, %s1624
          %s1627 = sshll.u32 %s1599, 4
          %s1628 = int_to_ptr.vmem [resolvable:$true] %s1627
          %s1629 = sshll.u32 %s1625, 4
          %s1630 = int_to_ptr.hbm [resolvable:$true] %s1629
          %1632 = dma.vmem_to_hbm [thread:$0]  %s1628, 128, %s1630, %s1596
        $region116: #{model_forward.1} parent=107 // pred_fallthru
          _
        // Predicated region
        $region117: #{model_forward.1} parent=107 // pred_check
          %p1633 = pneg %p584
        $region118: #{model_forward.1} parent=107 // pred_check_branch
          %1635 = sbr.rel (%p1633) target = $region120
        $region119: #{model_forward.1} parent=107 // pred_region
          %1637 = vsyncadd %s1601, 0
          %s1638 = smul.addr %s42, 8
          %s1639 = scalar_lea.hbm %s24, %s1638
          %s1641 = sshll.u32 %s1604, 4
          %s1642 = int_to_ptr.vmem [resolvable:$true] %s1641
          %s1643 = sshll.u32 %s1639, 4
          %s1644 = int_to_ptr.hbm [resolvable:$true] %s1643
          %1646 = dma.vmem_to_hbm [thread:$0]  %s1642, 128, %s1644, %s1601
        $region120: #{model_forward.1} parent=107 // pred_fallthru
          _
      $region108: #{model_forward.1} parent=5 // pred_fallthru
        _
      %p1647 = scmp.le.s32.totalorder 2, %s37
      // Predicated region
      $region121: #{model_forward.1} parent=5 // pred_check
        %p1648 = pneg %p1647
      $region122: #{model_forward.1} parent=5 // pred_check_branch
        %1650 = sbr.rel (%p1648) target = $region124
      $region123: #{model_forward.1} parent=5 // pred_region
        %s1651 = ssub.s32 %s37, 2
        // Predicated region
        $region125: #{model_forward.1} parent=123 // pred_check
          %p1652 = pneg %p538
        $region126: #{model_forward.1} parent=123 // pred_check_branch
          %1654 = sbr.rel (%p1652) target = $region128
        $region127: #{model_forward.1} parent=123 // pred_region
          %s1655 = sand.u32 %s523, 1
          %s1656 = scalar_lea.sflag [#allocation3], %s1655
          %s1657 = sand.u32 %s523, 1
          %s1658 = smul.addr %s1657, 8
          %s1659 = scalar_lea.vmem [#allocation2], %s1658
          %1661 = dma.done %s1656, 128
        $region128: #{model_forward.1} parent=123 // pred_fallthru
          _
        // Predicated region
        $region129: #{model_forward.1} parent=123 // pred_check
          %p1662 = pneg %p564
        $region130: #{model_forward.1} parent=123 // pred_check_branch
          %1664 = sbr.rel (%p1662) target = $region132
        $region131: #{model_forward.1} parent=123 // pred_region
          %s1665 = sand.u32 %s43, 1
          %s1666 = scalar_lea.sflag [#allocation5], %s1665
          %s1667 = sand.u32 %s549, 1
          %s1668 = smul.addr %s1667, 8
          %s1669 = scalar_lea.vmem [#allocation4], %s1668
          %1671 = dma.done %s1666, 128
        $region132: #{model_forward.1} parent=123 // pred_fallthru
          _
        // Predicated region
        $region133: #{model_forward.1} parent=123 // pred_check
          %p1672 = pneg %p590
        $region134: #{model_forward.1} parent=123 // pred_check_branch
          %1674 = sbr.rel (%p1672) target = $region136
        $region135: #{model_forward.1} parent=123 // pred_region
          %s1675 = sand.u32 %s43, 1
          %s1676 = scalar_lea.sflag [#allocation5], %s1675
          %s1677 = sand.u32 %s575, 1
          %s1678 = smul.addr %s1677, 8
          %s1679 = scalar_lea.vmem [#allocation6], %s1678
          %1681 = dma.done %s1676, 128
        $region136: #{model_forward.1} parent=123 // pred_fallthru
          _
      $region124: #{model_forward.1} parent=5 // pred_fallthru
        _
    $region6: #{model_forward.1} parent=1 // loop_footer
      %s41 = sadd.s32 1, %s37
    $region7: #{model_forward.1} parent=1 // loop_footer_branch
      %36 = sbr.rel target = $region3
    $region8: #{model_forward.1} parent=1 // loop_exit
      _
    %1682 = vsyncpa [#allocation3], 1
    %s1683 = scalar_lea.sflag [#allocation3], 1
    %1684 = vsyncpa %s1683, 1
    %1685 = vsyncpa [#allocation5], 1
    %s1686 = scalar_lea.sflag [#allocation5], 1
    %1687 = vsyncpa %s1686, 1

</llo_original>
